<compile_context>
chip_gen: v6e
topology: v6e:2x2x1
jax: 0.10.0
libtpu: 0.0.40
codegen_flags: <defaults>
</compile_context>

<pallas_src>
import math

import jax
import jax.numpy as jnp
from jax.experimental import pallas as pl
from jax.experimental.pallas import tpu as pltpu

HIDDEN = 512
OUT_LANES = 128   # lane-padded width of the final (512 -> 1) layer
MAX_TB = 128      # batch tile (fills MXU rows)


def _round_up(x, m):
    return ((x + m - 1) // m) * m


def _leaky_relu(x, slope=0.2):
    return jnp.where(x > 0, x, slope * x)


def _disc_kernel(x_ref, w1_ref, b1_ref, w2_ref, b2_ref, w3_ref, b3_ref,
                 w4_ref, b4_ref, o_ref):
    # x: (TB, D_in_pad) bf16; weights bf16; biases f32; accumulate in f32.
    x = x_ref[...]

    # Linear(D_in, 512) + LeakyReLU(0.2)
    h = jnp.dot(x, w1_ref[...], preferred_element_type=jnp.float32) + b1_ref[...]
    h = _leaky_relu(h)

    # Linear(512, 512) + Dropout(0.4)[eval: identity] + LeakyReLU(0.2)
    h = jnp.dot(h.astype(jnp.bfloat16), w2_ref[...],
                preferred_element_type=jnp.float32) + b2_ref[...]
    h = _leaky_relu(h)

    # Linear(512, 512) + Dropout(0.4)[eval: identity] + LeakyReLU(0.2)
    h = jnp.dot(h.astype(jnp.bfloat16), w3_ref[...],
                preferred_element_type=jnp.float32) + b3_ref[...]
    h = _leaky_relu(h)

    # Linear(512, 1), lane-padded to 128 output columns (col 0 is the real one).
    o = jnp.dot(h.astype(jnp.bfloat16), w4_ref[...],
                preferred_element_type=jnp.float32) + b4_ref[...]
    o_ref[...] = o.astype(o_ref.dtype)


def init_discriminator_params(key, img_dims, d_cond_label=None, dtype=jnp.float32):
    """PyTorch-style uniform(-1/sqrt(fan_in), 1/sqrt(fan_in)) init (f32 storage)."""
    d_in = int(math.prod(img_dims)) + (d_cond_label if d_cond_label is not None else 0)
    dims = [(d_in, HIDDEN), (HIDDEN, HIDDEN), (HIDDEN, HIDDEN), (HIDDEN, 1)]
    params = {}
    keys = jax.random.split(key, 2 * len(dims))
    for idx, (fin, fout) in enumerate(dims):
        bound = 1.0 / math.sqrt(fin)
        # stored as (in, out) so the kernel does x @ w (== PyTorch x @ W.T)
        params[f"w{idx + 1}"] = jax.random.uniform(
            keys[2 * idx], (fin, fout), dtype, minval=-bound, maxval=bound)
        params[f"b{idx + 1}"] = jax.random.uniform(
            keys[2 * idx + 1], (1, fout), dtype, minval=-bound, maxval=bound)
    return params


@jax.jit
def discriminator_forward(params, cond_label, img):
    """cond_label: (B, d_cond) or None; img: (B, C, H, W) NCHW. Returns (B, 1) f32."""
    b = img.shape[0]
    img_flat = img.reshape(b, -1)
    if cond_label is not None:
        x = jnp.concatenate([img_flat, cond_label], axis=1)
    else:
        x = img_flat
    d_in = x.shape[1]
    d_in_pad = _round_up(d_in, 128)

    # Batch tile: 128 for large batches; small batches pad only to a sublane multiple.
    tb = min(MAX_TB, _round_up(b, 8))
    b_pad = _round_up(b, tb)

    # Pad batch and feature dims (zero padding is numerically inert for the matmul).
    x = jnp.pad(x, ((0, b_pad - b), (0, d_in_pad - d_in))).astype(jnp.bfloat16)

    # Weights -> bf16 (f32 accumulation inside the kernel). Pad w1 K-dim and the
    # final layer's N-dim to 128 lanes so all MXU operands / stores are aligned.
    w1 = jnp.pad(params["w1"], ((0, d_in_pad - d_in), (0, 0))).astype(jnp.bfloat16)
    w2 = params["w2"].astype(jnp.bfloat16)
    w3 = params["w3"].astype(jnp.bfloat16)
    w4 = jnp.pad(params["w4"], ((0, 0), (0, OUT_LANES - 1))).astype(jnp.bfloat16)
    b1 = params["b1"]
    b2 = params["b2"]
    b3 = params["b3"]
    b4 = jnp.pad(params["b4"], ((0, 0), (0, OUT_LANES - 1)))

    grid = (b_pad // tb,)
    full = lambda i: (0, 0)

    flops = 2 * b_pad * (d_in_pad * HIDDEN + 2 * HIDDEN * HIDDEN + HIDDEN * OUT_LANES)
    bytes_accessed = (
        b_pad * d_in_pad * 2                         # x (bf16)
        + (d_in_pad + 2 * HIDDEN) * HIDDEN * 2       # w1..w3 (bf16)
        + HIDDEN * OUT_LANES * 2                     # w4 (bf16)
        + (3 * HIDDEN + OUT_LANES) * 4               # biases (f32)
        + b_pad * OUT_LANES * 4                      # output (f32)
    )

    out = pl.pallas_call(
        _disc_kernel,
        out_shape=jax.ShapeDtypeStruct((b_pad, OUT_LANES), jnp.float32),
        grid_spec=pltpu.PrefetchScalarGridSpec(
            num_scalar_prefetch=0,
            grid=grid,
            in_specs=[
                pl.BlockSpec((tb, d_in_pad), lambda i: (i, 0)),     # x tile
                pl.BlockSpec((d_in_pad, HIDDEN), full),             # w1
                pl.BlockSpec((1, HIDDEN), full),                    # b1
                pl.BlockSpec((HIDDEN, HIDDEN), full),               # w2
                pl.BlockSpec((1, HIDDEN), full),                    # b2
                pl.BlockSpec((HIDDEN, HIDDEN), full),               # w3
                pl.BlockSpec((1, HIDDEN), full),                    # b3
                pl.BlockSpec((HIDDEN, OUT_LANES), full),            # w4 (lane-padded)
                pl.BlockSpec((1, OUT_LANES), full),                 # b4 (lane-padded)
            ],
            out_specs=pl.BlockSpec((tb, OUT_LANES), lambda i: (i, 0)),
        ),
        compiler_params=pltpu.CompilerParams(
            dimension_semantics=("parallel",)),
        cost_estimate=pl.CostEstimate(
            flops=flops, transcendentals=0, bytes_accessed=bytes_accessed),
    )(x, w1, b1, w2, b2, w3, b3, w4, b4)

    # Drop the batch padding and the 127 zero lanes of the final layer.
    return out[:b, :1]


def _reference_forward(params, cond_label, img):
    """Pure-JAX reference mirroring the kernel's bf16-operand / f32-accum math."""
    b = img.shape[0]
    x = img.reshape(b, -1)
    if cond_label is not None:
        x = jnp.concatenate([x, cond_label], axis=1)
    x = x.astype(jnp.bfloat16)
    bf = lambda k: params[k].astype(jnp.bfloat16)
    h = jnp.dot(x, bf("w1"), preferred_element_type=jnp.float32) + params["b1"]
    h = jnp.where(h > 0, h, 0.2 * h)
    h = jnp.dot(h.astype(jnp.bfloat16), bf("w2"),
                preferred_element_type=jnp.float32) + params["b2"]
    h = jnp.where(h > 0, h, 0.2 * h)
    h = jnp.dot(h.astype(jnp.bfloat16), bf("w3"),
                preferred_element_type=jnp.float32) + params["b3"]
    h = jnp.where(h > 0, h, 0.2 * h)
    return jnp.dot(h.astype(jnp.bfloat16), bf("w4"),
                   preferred_element_type=jnp.float32) + params["b4"]


if __name__ == "__main__":
    key = jax.random.PRNGKey(0)
    k_img, k_lbl, k_par = jax.random.split(key, 3)

    img_dims = (1, 8, 8)        # (C, H, W) -> prod = 64 features
    d_cond_label = 8
    batch = 2

    img = jax.random.normal(k_img, (batch,) + img_dims, dtype=jnp.float32)  # NCHW
    cond_label = jax.random.normal(k_lbl, (batch, d_cond_label), dtype=jnp.float32)
    params = init_discriminator_params(k_par, img_dims, d_cond_label)

    validity = discriminator_forward(params, cond_label, img)
    validity = jax.block_until_ready(validity)

    ref = _reference_forward(params, cond_label, img)
    assert validity.shape == (batch, 1), validity.shape
    assert jnp.allclose(validity, ref, atol=1e-3, rtol=1e-3), (validity, ref)

    print("KERNEL_OK")
</pallas_src>

<mosaic_0001>
module attributes {stable_mosaic.version = 11 : i64} {
  func.func @_disc_kernel(%arg0: i32, %arg1: memref<8x128xbf16, #tpu.memory_space<vmem>>, %arg2: memref<128x512xbf16, #tpu.memory_space<vmem>>, %arg3: memref<1x512xf32, #tpu.memory_space<vmem>>, %arg4: memref<512x512xbf16, #tpu.memory_space<vmem>>, %arg5: memref<1x512xf32, #tpu.memory_space<vmem>>, %arg6: memref<512x512xbf16, #tpu.memory_space<vmem>>, %arg7: memref<1x512xf32, #tpu.memory_space<vmem>>, %arg8: memref<512x128xbf16, #tpu.memory_space<vmem>>, %arg9: memref<1x128xf32, #tpu.memory_space<vmem>>, %arg10: memref<8x128xf32, #tpu.memory_space<vmem>>) attributes {dimension_semantics = [#tpu.dimension_semantics<parallel>], iteration_bounds = array<i64: 1>, scalar_prefetch = 0 : i64, scratch_operands = 0 : i64, tpu.core_type = #tpu.core_type<tc>, window_params = [{transform_indices = @transform_0, window_bounds = array<i64: 8, 128>}, {pipeline_mode = #tpu.pipeline_mode<synchronous>, transform_indices = @transform_1, window_bounds = array<i64: 128, 512>}, {pipeline_mode = #tpu.pipeline_mode<synchronous>, transform_indices = @transform_2, window_bounds = array<i64: 1, 512>}, {pipeline_mode = #tpu.pipeline_mode<synchronous>, transform_indices = @transform_3, window_bounds = array<i64: 512, 512>}, {pipeline_mode = #tpu.pipeline_mode<synchronous>, transform_indices = @transform_4, window_bounds = array<i64: 1, 512>}, {pipeline_mode = #tpu.pipeline_mode<synchronous>, transform_indices = @transform_5, window_bounds = array<i64: 512, 512>}, {pipeline_mode = #tpu.pipeline_mode<synchronous>, transform_indices = @transform_6, window_bounds = array<i64: 1, 512>}, {pipeline_mode = #tpu.pipeline_mode<synchronous>, transform_indices = @transform_7, window_bounds = array<i64: 512, 128>}, {pipeline_mode = #tpu.pipeline_mode<synchronous>, transform_indices = @transform_8, window_bounds = array<i64: 1, 128>}, {transform_indices = @transform_9, window_bounds = array<i64: 8, 128>}]} {
    %c0 = arith.constant 0 : index
    %c0_0 = arith.constant 0 : index
    %0 = vector.load %arg1[%c0, %c0_0] : memref<8x128xbf16, #tpu.memory_space<vmem>>, vector<8x128xbf16>
    %c0_1 = arith.constant 0 : index
    %c0_2 = arith.constant 0 : index
    %1 = vector.load %arg2[%c0_1, %c0_2] : memref<128x512xbf16, #tpu.memory_space<vmem>>, vector<128x512xbf16>
    %cst = arith.constant dense<0.000000e+00> : vector<8x512xf32>
    %2 = tpu.matmul %0, %1, %cst {dimension_numbers = #tpu.dot_dimension_numbers<[1], [0], [0], [1], [0, 0, 1, 1], [], []>} : vector<8x128xbf16>, vector<128x512xbf16>, vector<8x512xf32> -> vector<8x512xf32>
    %c0_3 = arith.constant 0 : index
    %c0_4 = arith.constant 0 : index
    %3 = vector.load %arg3[%c0_3, %c0_4] : memref<1x512xf32, #tpu.memory_space<vmem>>, vector<1x512xf32>
    %4 = vector.broadcast %3 : vector<1x512xf32> to vector<8x512xf32>
    %5 = arith.addf %2, %4 : vector<8x512xf32>
    %cst_5 = arith.constant 0.000000e+00 : f32
    %6 = vector.broadcast %cst_5 : f32 to vector<8x512xf32>
    %7 = arith.cmpf ogt, %5, %6 : vector<8x512xf32>
    %cst_6 = arith.constant 2.000000e-01 : f32
    %8 = vector.broadcast %cst_6 : f32 to vector<8x512xf32>
    %9 = arith.mulf %8, %5 : vector<8x512xf32>
    %10 = arith.select %7, %5, %9 : vector<8x512xi1>, vector<8x512xf32>
    %11 = arith.truncf %10 : vector<8x512xf32> to vector<8x512xbf16>
    %c0_7 = arith.constant 0 : index
    %c0_8 = arith.constant 0 : index
    %12 = vector.load %arg4[%c0_7, %c0_8] : memref<512x512xbf16, #tpu.memory_space<vmem>>, vector<512x512xbf16>
    %cst_9 = arith.constant dense<0.000000e+00> : vector<8x512xf32>
    %13 = tpu.matmul %11, %12, %cst_9 {dimension_numbers = #tpu.dot_dimension_numbers<[1], [0], [0], [1], [0, 0, 1, 1], [], []>} : vector<8x512xbf16>, vector<512x512xbf16>, vector<8x512xf32> -> vector<8x512xf32>
    %c0_10 = arith.constant 0 : index
    %c0_11 = arith.constant 0 : index
    %14 = vector.load %arg5[%c0_10, %c0_11] : memref<1x512xf32, #tpu.memory_space<vmem>>, vector<1x512xf32>
    %15 = vector.broadcast %14 : vector<1x512xf32> to vector<8x512xf32>
    %16 = arith.addf %13, %15 : vector<8x512xf32>
    %cst_12 = arith.constant 0.000000e+00 : f32
    %17 = vector.broadcast %cst_12 : f32 to vector<8x512xf32>
    %18 = arith.cmpf ogt, %16, %17 : vector<8x512xf32>
    %cst_13 = arith.constant 2.000000e-01 : f32
    %19 = vector.broadcast %cst_13 : f32 to vector<8x512xf32>
    %20 = arith.mulf %19, %16 : vector<8x512xf32>
    %21 = arith.select %18, %16, %20 : vector<8x512xi1>, vector<8x512xf32>
    %22 = arith.truncf %21 : vector<8x512xf32> to vector<8x512xbf16>
    %c0_14 = arith.constant 0 : index
    %c0_15 = arith.constant 0 : index
    %23 = vector.load %arg6[%c0_14, %c0_15] : memref<512x512xbf16, #tpu.memory_space<vmem>>, vector<512x512xbf16>
    %cst_16 = arith.constant dense<0.000000e+00> : vector<8x512xf32>
    %24 = tpu.matmul %22, %23, %cst_16 {dimension_numbers = #tpu.dot_dimension_numbers<[1], [0], [0], [1], [0, 0, 1, 1], [], []>} : vector<8x512xbf16>, vector<512x512xbf16>, vector<8x512xf32> -> vector<8x512xf32>
    %c0_17 = arith.constant 0 : index
    %c0_18 = arith.constant 0 : index
    %25 = vector.load %arg7[%c0_17, %c0_18] : memref<1x512xf32, #tpu.memory_space<vmem>>, vector<1x512xf32>
    %26 = vector.broadcast %25 : vector<1x512xf32> to vector<8x512xf32>
    %27 = arith.addf %24, %26 : vector<8x512xf32>
    %cst_19 = arith.constant 0.000000e+00 : f32
    %28 = vector.broadcast %cst_19 : f32 to vector<8x512xf32>
    %29 = arith.cmpf ogt, %27, %28 : vector<8x512xf32>
    %cst_20 = arith.constant 2.000000e-01 : f32
    %30 = vector.broadcast %cst_20 : f32 to vector<8x512xf32>
    %31 = arith.mulf %30, %27 : vector<8x512xf32>
    %32 = arith.select %29, %27, %31 : vector<8x512xi1>, vector<8x512xf32>
    %33 = arith.truncf %32 : vector<8x512xf32> to vector<8x512xbf16>
    %c0_21 = arith.constant 0 : index
    %c0_22 = arith.constant 0 : index
    %34 = vector.load %arg8[%c0_21, %c0_22] : memref<512x128xbf16, #tpu.memory_space<vmem>>, vector<512x128xbf16>
    %cst_23 = arith.constant dense<0.000000e+00> : vector<8x128xf32>
    %35 = tpu.matmul %33, %34, %cst_23 {dimension_numbers = #tpu.dot_dimension_numbers<[1], [0], [0], [1], [0, 0, 1, 1], [], []>} : vector<8x512xbf16>, vector<512x128xbf16>, vector<8x128xf32> -> vector<8x128xf32>
    %c0_24 = arith.constant 0 : index
    %c0_25 = arith.constant 0 : index
    %36 = vector.load %arg9[%c0_24, %c0_25] : memref<1x128xf32, #tpu.memory_space<vmem>>, vector<1x128xf32>
    %37 = vector.broadcast %36 : vector<1x128xf32> to vector<8x128xf32>
    %38 = arith.addf %35, %37 : vector<8x128xf32>
    %c0_26 = arith.constant 0 : index
    %c0_27 = arith.constant 0 : index
    %39 = vector.load %arg10[%c0_26, %c0_27] : memref<8x128xf32, #tpu.memory_space<vmem>>, vector<8x128xf32>
    tpu.vector_store %arg10[%c0_26, %c0_27], %38 {strides = array<i32>} : memref<8x128xf32, #tpu.memory_space<vmem>>, vector<8x128xf32>,
    return
  }
  func.func @transform_0(%arg0: i32) -> (i32, i32) {
    %c0_i32 = arith.constant 0 : i32
    %c0_i32_0 = arith.constant 0 : i32
    return %arg0, %c0_i32 : i32, i32
  }
  func.func @transform_1(%arg0: i32) -> (i32, i32) {
    %c0_i32 = arith.constant 0 : i32
    %c0_i32_0 = arith.constant 0 : i32
    %c0_i32_1 = arith.constant 0 : i32
    return %c0_i32, %c0_i32_0 : i32, i32
  }
  func.func @transform_2(%arg0: i32) -> (i32, i32) {
    %c0_i32 = arith.constant 0 : i32
    %c0_i32_0 = arith.constant 0 : i32
    %c0_i32_1 = arith.constant 0 : i32
    return %c0_i32, %c0_i32_0 : i32, i32
  }
  func.func @transform_3(%arg0: i32) -> (i32, i32) {
    %c0_i32 = arith.constant 0 : i32
    %c0_i32_0 = arith.constant 0 : i32
    %c0_i32_1 = arith.constant 0 : i32
    return %c0_i32, %c0_i32_0 : i32, i32
  }
  func.func @transform_4(%arg0: i32) -> (i32, i32) {
    %c0_i32 = arith.constant 0 : i32
    %c0_i32_0 = arith.constant 0 : i32
    %c0_i32_1 = arith.constant 0 : i32
    return %c0_i32, %c0_i32_0 : i32, i32
  }
  func.func @transform_5(%arg0: i32) -> (i32, i32) {
    %c0_i32 = arith.constant 0 : i32
    %c0_i32_0 = arith.constant 0 : i32
    %c0_i32_1 = arith.constant 0 : i32
    return %c0_i32, %c0_i32_0 : i32, i32
  }
  func.func @transform_6(%arg0: i32) -> (i32, i32) {
    %c0_i32 = arith.constant 0 : i32
    %c0_i32_0 = arith.constant 0 : i32
    %c0_i32_1 = arith.constant 0 : i32
    return %c0_i32, %c0_i32_0 : i32, i32
  }
  func.func @transform_7(%arg0: i32) -> (i32, i32) {
    %c0_i32 = arith.constant 0 : i32
    %c0_i32_0 = arith.constant 0 : i32
    %c0_i32_1 = arith.constant 0 : i32
    return %c0_i32, %c0_i32_0 : i32, i32
  }
  func.func @transform_8(%arg0: i32) -> (i32, i32) {
    %c0_i32 = arith.constant 0 : i32
    %c0_i32_0 = arith.constant 0 : i32
    %c0_i32_1 = arith.constant 0 : i32
    return %c0_i32, %c0_i32_0 : i32, i32
  }
  func.func @transform_9(%arg0: i32) -> (i32, i32) {
    %c0_i32 = arith.constant 0 : i32
    %c0_i32_0 = arith.constant 0 : i32
    return %arg0, %c0_i32 : i32, i32
  }
}

</mosaic_0001>

<llo_original>
// kernel: discriminator_forward.1
$region0: #{discriminator_forward.1}
  #allocation0 [shape = 'u32[]', space=smem, size = 0x4, offset = 0x4, fixed_abs, tag = 'smem constant byte address 0x4 - core index']
  #allocation1 [shape = 'u32[144,128]{1,0:T(1,128)}', space=vmem, size = 0x12000, scoped, tag = 'internal scratch']
  %s0 = inlined_call_operand.vmem [shape: bf16[8,128], index: 0, kind: input, shape index: {}]
  %s1 = inlined_call_operand.vmem [shape: bf16[128,512], index: 1, kind: input, shape index: {}]
  %s2 = inlined_call_operand.vmem [shape: f32[1,512], index: 2, kind: input, shape index: {}]
  %s3 = inlined_call_operand.vmem [shape: bf16[512,512], index: 3, kind: input, shape index: {}]
  %s4 = inlined_call_operand.vmem [shape: f32[1,512], index: 4, kind: input, shape index: {}]
  %s5 = inlined_call_operand.vmem [shape: bf16[512,512], index: 5, kind: input, shape index: {}]
  %s6 = inlined_call_operand.vmem [shape: f32[1,512], index: 6, kind: input, shape index: {}]
  %s7 = inlined_call_operand.vmem [shape: bf16[512,128], index: 7, kind: input, shape index: {}]
  %s8 = inlined_call_operand.vmem [shape: f32[1,128], index: 8, kind: input, shape index: {}]
  %s9 = inlined_call_operand.vmem [shape: f32[8,128], index: 9, kind: output, shape index: {}]
  %s10 = sld [smem:[#allocation0]]
  $region46: #{discriminator_forward.1} parent=0
    _
  %s12 = ssub.s32 1, %s10
  %s13 = scalar_select 0, %s12, %s10
  // Predicated region
  $region2: #{discriminator_forward.1} parent=0 // pred_check
    _
  $region3: #{discriminator_forward.1} parent=0 // pred_check_branch
    %15 = sbr.rel (0) target = $region5
  $region4: #{discriminator_forward.1} parent=0 // pred_region
    _
  $region5: #{discriminator_forward.1} parent=0 // pred_fallthru
    _
  // Predicated region
  $region6: #{discriminator_forward.1} parent=0 // pred_check
    _
  $region7: #{discriminator_forward.1} parent=0 // pred_check_branch
    %17 = sbr.rel (0) target = $region9
  $region8: #{discriminator_forward.1} parent=0 // pred_region
    _
  $region9: #{discriminator_forward.1} parent=0 // pred_fallthru
    _
  // Predicated region
  $region10: #{discriminator_forward.1} parent=0 // pred_check
    _
  $region11: #{discriminator_forward.1} parent=0 // pred_check_branch
    %19 = sbr.rel (0) target = $region13
  $region12: #{discriminator_forward.1} parent=0 // pred_region
    _
  $region13: #{discriminator_forward.1} parent=0 // pred_fallthru
    _
  // Predicated region
  $region14: #{discriminator_forward.1} parent=0 // pred_check
    _
  $region15: #{discriminator_forward.1} parent=0 // pred_check_branch
    %21 = sbr.rel (0) target = $region17
  $region16: #{discriminator_forward.1} parent=0 // pred_region
    _
  $region17: #{discriminator_forward.1} parent=0 // pred_fallthru
    _
  // Predicated region
  $region18: #{discriminator_forward.1} parent=0 // pred_check
    _
  $region19: #{discriminator_forward.1} parent=0 // pred_check_branch
    %23 = sbr.rel (0) target = $region21
  $region20: #{discriminator_forward.1} parent=0 // pred_region
    _
  $region21: #{discriminator_forward.1} parent=0 // pred_fallthru
    _
  // Predicated region
  $region22: #{discriminator_forward.1} parent=0 // pred_check
    _
  $region23: #{discriminator_forward.1} parent=0 // pred_check_branch
    %25 = sbr.rel (0) target = $region25
  $region24: #{discriminator_forward.1} parent=0 // pred_region
    _
  $region25: #{discriminator_forward.1} parent=0 // pred_fallthru
    _
  // Predicated region
  $region26: #{discriminator_forward.1} parent=0 // pred_check
    _
  $region27: #{discriminator_forward.1} parent=0 // pred_check_branch
    %27 = sbr.rel (0) target = $region29
  $region28: #{discriminator_forward.1} parent=0 // pred_region
    _
  $region29: #{discriminator_forward.1} parent=0 // pred_fallthru
    _
  // Predicated region
  $region30: #{discriminator_forward.1} parent=0 // pred_check
    _
  $region31: #{discriminator_forward.1} parent=0 // pred_check_branch
    %29 = sbr.rel (0) target = $region33
  $region32: #{discriminator_forward.1} parent=0 // pred_region
    _
  $region33: #{discriminator_forward.1} parent=0 // pred_fallthru
    _
  // Predicated region
  $region34: #{discriminator_forward.1} parent=0 // pred_check
    _
  $region35: #{discriminator_forward.1} parent=0 // pred_check_branch
    %31 = sbr.rel (0) target = $region37
  $region36: #{discriminator_forward.1} parent=0 // pred_region
    _
  $region37: #{discriminator_forward.1} parent=0 // pred_fallthru
    _
  %v33 = vld [vmem:[%s0] sm:$0xf]
  %v34 = vld [vmem:[%s1] sm:$0xff]
  %v35 = vld [vmem:[%s1 + $0x8] sm:$0xff]
  %v36 = vld [vmem:[%s1 + $0x10] sm:$0xff]
  %v37 = vld [vmem:[%s1 + $0x18] sm:$0xff]
  %v38 = vld [vmem:[%s1 + $0x20] sm:$0xff]
  %v39 = vld [vmem:[%s1 + $0x28] sm:$0xff]
  %v40 = vld [vmem:[%s1 + $0x30] sm:$0xff]
  %v41 = vld [vmem:[%s1 + $0x38] sm:$0xff]
  %v42 = vld [vmem:[%s1 + $0x40] sm:$0xff]
  %v43 = vld [vmem:[%s1 + $0x48] sm:$0xff]
  %v44 = vld [vmem:[%s1 + $0x50] sm:$0xff]
  %v45 = vld [vmem:[%s1 + $0x58] sm:$0xff]
  %v46 = vld [vmem:[%s1 + $0x60] sm:$0xff]
  %v47 = vld [vmem:[%s1 + $0x68] sm:$0xff]
  %v48 = vld [vmem:[%s1 + $0x70] sm:$0xff]
  %v49 = vld [vmem:[%s1 + $0x78] sm:$0xff]
  %v50 = vld [vmem:[%s1 + $0x80] sm:$0xff]
  %v51 = vld [vmem:[%s1 + $0x88] sm:$0xff]
  %v52 = vld [vmem:[%s1 + $0x90] sm:$0xff]
  %v53 = vld [vmem:[%s1 + $0x98] sm:$0xff]
  %v54 = vld [vmem:[%s1 + $0xa0] sm:$0xff]
  %v55 = vld [vmem:[%s1 + $0xa8] sm:$0xff]
  %v56 = vld [vmem:[%s1 + $0xb0] sm:$0xff]
  %v57 = vld [vmem:[%s1 + $0xb8] sm:$0xff]
  %v58 = vld [vmem:[%s1 + $0xc0] sm:$0xff]
  %v59 = vld [vmem:[%s1 + $0xc8] sm:$0xff]
  %v60 = vld [vmem:[%s1 + $0xd0] sm:$0xff]
  %v61 = vld [vmem:[%s1 + $0xd8] sm:$0xff]
  %v62 = vld [vmem:[%s1 + $0xe0] sm:$0xff]
  %v63 = vld [vmem:[%s1 + $0xe8] sm:$0xff]
  %v64 = vld [vmem:[%s1 + $0xf0] sm:$0xff]
  %v65 = vld [vmem:[%s1 + $0xf8] sm:$0xff]
  %v66 = vld [vmem:[%s2] sm:$0xf]
  %v68 = vlaneseq
  %v69 = vshrl.u32 %v68, 7
  %v70 = vsub.s32 0, %v69
  %v71 = vrot.slane %v66, %v70
  %v72 = vlaneseq
  %v73 = vshrl.u32 %v72, 7
  %v74 = vsub.s32 1, %v73
  %v75 = vrot.slane %v66, %v74
  %v76 = vlaneseq
  %v77 = vshrl.u32 %v76, 7
  %v78 = vsub.s32 2, %v77
  %v79 = vrot.slane %v66, %v78
  %v80 = vlaneseq
  %v81 = vshrl.u32 %v80, 7
  %v82 = vsub.s32 3, %v81
  %v83 = vrot.slane %v66, %v82
  %v120 = vunpack.c.l.b16 %v34
  %v121 = vunpack.c.h.b16 %v34
  %v122 = vunpack.c.l.b16 %v35
  %v123 = vunpack.c.h.b16 %v35
  %v124 = vunpack.c.l.b16 %v36
  %v125 = vunpack.c.h.b16 %v36
  %v126 = vunpack.c.l.b16 %v37
  %v127 = vunpack.c.h.b16 %v37
  %v128 = vunpack.c.l.b16 %v38
  %v129 = vunpack.c.h.b16 %v38
  %v130 = vunpack.c.l.b16 %v39
  %v131 = vunpack.c.h.b16 %v39
  %v132 = vunpack.c.l.b16 %v40
  %v133 = vunpack.c.h.b16 %v40
  %v134 = vunpack.c.l.b16 %v41
  %v135 = vunpack.c.h.b16 %v41
  %v136 = vunpack.c.l.b16 %v42
  %v137 = vunpack.c.h.b16 %v42
  %v138 = vunpack.c.l.b16 %v43
  %v139 = vunpack.c.h.b16 %v43
  %v140 = vunpack.c.l.b16 %v44
  %v141 = vunpack.c.h.b16 %v44
  %v142 = vunpack.c.l.b16 %v45
  %v143 = vunpack.c.h.b16 %v45
  %v144 = vunpack.c.l.b16 %v46
  %v145 = vunpack.c.h.b16 %v46
  %v146 = vunpack.c.l.b16 %v47
  %v147 = vunpack.c.h.b16 %v47
  %v148 = vunpack.c.l.b16 %v48
  %v149 = vunpack.c.h.b16 %v48
  %v150 = vunpack.c.l.b16 %v49
  %v151 = vunpack.c.h.b16 %v49
  %v152 = vunpack.c.l.b16 %v50
  %v153 = vunpack.c.h.b16 %v50
  %v154 = vunpack.c.l.b16 %v51
  %v155 = vunpack.c.h.b16 %v51
  %v156 = vunpack.c.l.b16 %v52
  %v157 = vunpack.c.h.b16 %v52
  %v158 = vunpack.c.l.b16 %v53
  %v159 = vunpack.c.h.b16 %v53
  %v160 = vunpack.c.l.b16 %v54
  %v161 = vunpack.c.h.b16 %v54
  %v162 = vunpack.c.l.b16 %v55
  %v163 = vunpack.c.h.b16 %v55
  %v164 = vunpack.c.l.b16 %v56
  %v165 = vunpack.c.h.b16 %v56
  %v166 = vunpack.c.l.b16 %v57
  %v167 = vunpack.c.h.b16 %v57
  %v168 = vunpack.c.l.b16 %v58
  %v169 = vunpack.c.h.b16 %v58
  %v170 = vunpack.c.l.b16 %v59
  %v171 = vunpack.c.h.b16 %v59
  %v172 = vunpack.c.l.b16 %v60
  %v173 = vunpack.c.h.b16 %v60
  %v174 = vunpack.c.l.b16 %v61
  %v175 = vunpack.c.h.b16 %v61
  %v176 = vunpack.c.l.b16 %v62
  %v177 = vunpack.c.h.b16 %v62
  %v178 = vunpack.c.l.b16 %v63
  %v179 = vunpack.c.h.b16 %v63
  %v180 = vunpack.c.l.b16 %v64
  %v181 = vunpack.c.h.b16 %v64
  %v182 = vunpack.c.l.b16 %v65
  %v183 = vunpack.c.h.b16 %v65
  %v184 = vpack.c.b16 %v124, %v120
  %v185 = vpack.c.b16 %v125, %v121
  %v186 = vpack.c.b16 %v126, %v122
  %v187 = vpack.c.b16 %v127, %v123
  %v188 = vpack.c.b16 %v132, %v128
  %v189 = vpack.c.b16 %v133, %v129
  %v190 = vpack.c.b16 %v134, %v130
  %v191 = vpack.c.b16 %v135, %v131
  %v192 = vpack.c.b16 %v140, %v136
  %v193 = vpack.c.b16 %v141, %v137
  %v194 = vpack.c.b16 %v142, %v138
  %v195 = vpack.c.b16 %v143, %v139
  %v196 = vpack.c.b16 %v148, %v144
  %v197 = vpack.c.b16 %v149, %v145
  %v198 = vpack.c.b16 %v150, %v146
  %v199 = vpack.c.b16 %v151, %v147
  %v200 = vpack.c.b16 %v156, %v152
  %v201 = vpack.c.b16 %v157, %v153
  %v202 = vpack.c.b16 %v158, %v154
  %v203 = vpack.c.b16 %v159, %v155
  %v204 = vpack.c.b16 %v164, %v160
  %v205 = vpack.c.b16 %v165, %v161
  %v206 = vpack.c.b16 %v166, %v162
  %v207 = vpack.c.b16 %v167, %v163
  %v208 = vpack.c.b16 %v172, %v168
  %v209 = vpack.c.b16 %v173, %v169
  %v210 = vpack.c.b16 %v174, %v170
  %v211 = vpack.c.b16 %v175, %v171
  %v212 = vpack.c.b16 %v180, %v176
  %v213 = vpack.c.b16 %v181, %v177
  %v214 = vpack.c.b16 %v182, %v178
  %v215 = vpack.c.b16 %v183, %v179
  %248 = vmatprep.subr.bf16.mxu0 %v213
  %249 = vmatpush1.bf16.msra.mxu0 %v212
  %250 = vmatprep.subr.bf16.mxu0 %v209
  %251 = vmatpush1.bf16.msra.mxu0 %v208
  %252 = vmatprep.subr.bf16.mxu0 %v205
  %253 = vmatpush1.bf16.msra.mxu0 %v204
  %254 = vmatprep.subr.bf16.mxu0 %v201
  %255 = vmatpush1.bf16.msra.mxu0 %v200
  %256 = vmatprep.subr.bf16.mxu0 %v197
  %257 = vmatpush1.bf16.msra.mxu0 %v196
  %258 = vmatprep.subr.bf16.mxu0 %v193
  %259 = vmatpush1.bf16.msra.mxu0 %v192
  %260 = vmatprep.subr.bf16.mxu0 %v189
  %261 = vmatpush1.bf16.msra.mxu0 %v188
  %262 = vmatprep.subr.bf16.mxu0 %v185
  %263 = vmatpush1.bf16.msra.mxu0 %v184
  %264 = vmatprep.subr.bf16.mxu0 0
  %265 = vmatpush2.bf16.msra.mxu0 0
  %266 = vmatprep.subr.bf16.mxu0 0
  %267 = vmatpush2.bf16.msra.mxu0 0
  %268 = vmatprep.subr.bf16.mxu0 0
  %269 = vmatpush2.bf16.msra.mxu0 0
  %270 = vmatprep.subr.bf16.mxu0 0
  %271 = vmatpush2.bf16.msra.mxu0 0
  %272 = vmatprep.subr.bf16.mxu0 0
  %273 = vmatpush2.bf16.msra.mxu0 0
  %274 = vmatprep.subr.bf16.mxu0 0
  %275 = vmatpush2.bf16.msra.mxu0 0
  %276 = vmatprep.subr.bf16.mxu0 0
  %277 = vmatpush2.bf16.msra.mxu0 0
  %278 = vmatprep.subr.bf16.mxu0 0
  %279 = vmatpush2.bf16.msra.mxu0 0
  %280 = vmatprep.mubr.bf16.mxu0 0
  %281 = vmatmul.mubr.bf16.gmra.mxu0 %v33
  %v282 = vpop.f32.mrf.mxu0
  %v283 = vadd.f32 %v71, %v282
  %v284 = vpop.f32.mrf.mxu0
  %v285 = vadd.f32 %v75, %v284
  %v286 = vpop.f32.mrf.mxu0
  %v287 = vpop.f32.mrf.mxu0
  %288 = vdwg.mxu0
  %289 = vmatprep.subr.bf16.mxu0 %v215
  %290 = vmatpush1.bf16.msra.mxu0 %v214
  %291 = vmatprep.subr.bf16.mxu0 %v211
  %292 = vmatpush1.bf16.msra.mxu0 %v210
  %293 = vmatprep.subr.bf16.mxu0 %v207
  %294 = vmatpush1.bf16.msra.mxu0 %v206
  %295 = vmatprep.subr.bf16.mxu0 %v203
  %296 = vmatpush1.bf16.msra.mxu0 %v202
  %297 = vmatprep.subr.bf16.mxu0 %v199
  %298 = vmatpush1.bf16.msra.mxu0 %v198
  %299 = vmatprep.subr.bf16.mxu0 %v195
  %300 = vmatpush1.bf16.msra.mxu0 %v194
  %301 = vmatprep.subr.bf16.mxu0 %v191
  %302 = vmatpush1.bf16.msra.mxu0 %v190
  %303 = vmatprep.subr.bf16.mxu0 %v187
  %304 = vmatpush1.bf16.msra.mxu0 %v186
  %305 = vmatprep.subr.bf16.mxu0 0
  %306 = vmatpush2.bf16.msra.mxu0 0
  %307 = vmatprep.subr.bf16.mxu0 0
  %308 = vmatpush2.bf16.msra.mxu0 0
  %309 = vmatprep.subr.bf16.mxu0 0
  %310 = vmatpush2.bf16.msra.mxu0 0
  %311 = vmatprep.subr.bf16.mxu0 0
  %312 = vmatpush2.bf16.msra.mxu0 0
  %313 = vmatprep.subr.bf16.mxu0 0
  %314 = vmatpush2.bf16.msra.mxu0 0
  %315 = vmatprep.subr.bf16.mxu0 0
  %316 = vmatpush2.bf16.msra.mxu0 0
  %317 = vmatprep.subr.bf16.mxu0 0
  %318 = vmatpush2.bf16.msra.mxu0 0
  %319 = vmatprep.subr.bf16.mxu0 0
  %320 = vmatpush2.bf16.msra.mxu0 0
  %321 = vmatprep.mubr.bf16.mxu0 0
  %322 = vmatmul.mubr.bf16.gmra.mxu0 %v33
  %v323 = vpop.f32.mrf.mxu0
  %v324 = vadd.f32 %v79, %v323
  %v325 = vpop.f32.mrf.mxu0
  %v326 = vadd.f32 %v83, %v325
  %v327 = vpop.f32.mrf.mxu0
  %v328 = vpop.f32.mrf.mxu0
  %329 = vdwg.mxu0
  %vm330 = vcmp.gt.f32.partialorder %v283, 0.0
  %vm331 = vcmp.gt.f32.partialorder %v285, 0.0
  %vm332 = vcmp.gt.f32.partialorder %v324, 0.0
  %vm333 = vcmp.gt.f32.partialorder %v326, 0.0
  %v334 = vmul.f32 %v283, 0.2
  %v335 = vmul.f32 %v285, 0.2
  %v336 = vmul.f32 %v324, 0.2
  %v337 = vmul.f32 %v326, 0.2
  %v338 = vsel %vm330, %v283, %v334
  %v339 = vsel %vm331, %v285, %v335
  %v340 = vsel %vm332, %v324, %v336
  %v341 = vsel %vm333, %v326, %v337
  %v342 = vpack.c.bf16 %v338, %v338
  %v343 = vpack.c.bf16 %v339, %v339
  %v344 = vpack.c.bf16 %v340, %v340
  %v345 = vpack.c.bf16 %v341, %v341
  %v346 = vld [vmem:[%s3] sm:$0xff]
  %v347 = vld [vmem:[%s3 + $0x8] sm:$0xff]
  %v348 = vld [vmem:[%s3 + $0x10] sm:$0xff]
  %v349 = vld [vmem:[%s3 + $0x18] sm:$0xff]
  %v350 = vld [vmem:[%s3 + $0x20] sm:$0xff]
  %v351 = vld [vmem:[%s3 + $0x28] sm:$0xff]
  %v352 = vld [vmem:[%s3 + $0x30] sm:$0xff]
  %v353 = vld [vmem:[%s3 + $0x38] sm:$0xff]
  %v354 = vld [vmem:[%s3 + $0x40] sm:$0xff]
  %v355 = vld [vmem:[%s3 + $0x48] sm:$0xff]
  %v356 = vld [vmem:[%s3 + $0x50] sm:$0xff]
  %v357 = vld [vmem:[%s3 + $0x58] sm:$0xff]
  %v358 = vld [vmem:[%s3 + $0x60] sm:$0xff]
  %v359 = vld [vmem:[%s3 + $0x68] sm:$0xff]
  %v360 = vld [vmem:[%s3 + $0x70] sm:$0xff]
  %v361 = vld [vmem:[%s3 + $0x78] sm:$0xff]
  %v362 = vld [vmem:[%s3 + $0x80] sm:$0xff]
  %v363 = vld [vmem:[%s3 + $0x88] sm:$0xff]
  %v364 = vld [vmem:[%s3 + $0x90] sm:$0xff]
  %v365 = vld [vmem:[%s3 + $0x98] sm:$0xff]
  %v366 = vld [vmem:[%s3 + $0xa0] sm:$0xff]
  %v367 = vld [vmem:[%s3 + $0xa8] sm:$0xff]
  %v368 = vld [vmem:[%s3 + $0xb0] sm:$0xff]
  %v369 = vld [vmem:[%s3 + $0xb8] sm:$0xff]
  %v370 = vld [vmem:[%s3 + $0xc0] sm:$0xff]
  %v371 = vld [vmem:[%s3 + $0xc8] sm:$0xff]
  %v372 = vld [vmem:[%s3 + $0xd0] sm:$0xff]
  %v373 = vld [vmem:[%s3 + $0xd8] sm:$0xff]
  %v374 = vld [vmem:[%s3 + $0xe0] sm:$0xff]
  %v375 = vld [vmem:[%s3 + $0xe8] sm:$0xff]
  %v376 = vld [vmem:[%s3 + $0xf0] sm:$0xff]
  %v377 = vld [vmem:[%s3 + $0xf8] sm:$0xff]
  %v378 = vld [vmem:[%s3 + $0x100] sm:$0xff]
  %v379 = vld [vmem:[%s3 + $0x108] sm:$0xff]
  %v380 = vld [vmem:[%s3 + $0x110] sm:$0xff]
  %v381 = vld [vmem:[%s3 + $0x118] sm:$0xff]
  %v382 = vld [vmem:[%s3 + $0x120] sm:$0xff]
  %v383 = vld [vmem:[%s3 + $0x128] sm:$0xff]
  %v384 = vld [vmem:[%s3 + $0x130] sm:$0xff]
  %v385 = vld [vmem:[%s3 + $0x138] sm:$0xff]
  %v386 = vld [vmem:[%s3 + $0x140] sm:$0xff]
  %v387 = vld [vmem:[%s3 + $0x148] sm:$0xff]
  %v388 = vld [vmem:[%s3 + $0x150] sm:$0xff]
  %v389 = vld [vmem:[%s3 + $0x158] sm:$0xff]
  %v390 = vld [vmem:[%s3 + $0x160] sm:$0xff]
  %v391 = vld [vmem:[%s3 + $0x168] sm:$0xff]
  %v392 = vld [vmem:[%s3 + $0x170] sm:$0xff]
  %v393 = vld [vmem:[%s3 + $0x178] sm:$0xff]
  %v394 = vld [vmem:[%s3 + $0x180] sm:$0xff]
  %v395 = vld [vmem:[%s3 + $0x188] sm:$0xff]
  %v396 = vld [vmem:[%s3 + $0x190] sm:$0xff]
  %v397 = vld [vmem:[%s3 + $0x198] sm:$0xff]
  %v398 = vld [vmem:[%s3 + $0x1a0] sm:$0xff]
  %v399 = vld [vmem:[%s3 + $0x1a8] sm:$0xff]
  %v400 = vld [vmem:[%s3 + $0x1b0] sm:$0xff]
  %v401 = vld [vmem:[%s3 + $0x1b8] sm:$0xff]
  %v402 = vld [vmem:[%s3 + $0x1c0] sm:$0xff]
  %v403 = vld [vmem:[%s3 + $0x1c8] sm:$0xff]
  %v404 = vld [vmem:[%s3 + $0x1d0] sm:$0xff]
  %v405 = vld [vmem:[%s3 + $0x1d8] sm:$0xff]
  %v406 = vld [vmem:[%s3 + $0x1e0] sm:$0xff]
  %v407 = vld [vmem:[%s3 + $0x1e8] sm:$0xff]
  %v408 = vld [vmem:[%s3 + $0x1f0] sm:$0xff]
  %v409 = vld [vmem:[%s3 + $0x1f8] sm:$0xff]
  %v410 = vld [vmem:[%s3 + $0x200] sm:$0xff]
  %v411 = vld [vmem:[%s3 + $0x208] sm:$0xff]
  %v412 = vld [vmem:[%s3 + $0x210] sm:$0xff]
  %v413 = vld [vmem:[%s3 + $0x218] sm:$0xff]
  %v414 = vld [vmem:[%s3 + $0x220] sm:$0xff]
  %v415 = vld [vmem:[%s3 + $0x228] sm:$0xff]
  %v416 = vld [vmem:[%s3 + $0x230] sm:$0xff]
  %v417 = vld [vmem:[%s3 + $0x238] sm:$0xff]
  %v418 = vld [vmem:[%s3 + $0x240] sm:$0xff]
  %v419 = vld [vmem:[%s3 + $0x248] sm:$0xff]
  %v420 = vld [vmem:[%s3 + $0x250] sm:$0xff]
  %v421 = vld [vmem:[%s3 + $0x258] sm:$0xff]
  %v422 = vld [vmem:[%s3 + $0x260] sm:$0xff]
  %v423 = vld [vmem:[%s3 + $0x268] sm:$0xff]
  %v424 = vld [vmem:[%s3 + $0x270] sm:$0xff]
  %v425 = vld [vmem:[%s3 + $0x278] sm:$0xff]
  %v426 = vld [vmem:[%s3 + $0x280] sm:$0xff]
  %v427 = vld [vmem:[%s3 + $0x288] sm:$0xff]
  %v428 = vld [vmem:[%s3 + $0x290] sm:$0xff]
  %v429 = vld [vmem:[%s3 + $0x298] sm:$0xff]
  %v430 = vld [vmem:[%s3 + $0x2a0] sm:$0xff]
  %v431 = vld [vmem:[%s3 + $0x2a8] sm:$0xff]
  %v432 = vld [vmem:[%s3 + $0x2b0] sm:$0xff]
  %v433 = vld [vmem:[%s3 + $0x2b8] sm:$0xff]
  %v434 = vld [vmem:[%s3 + $0x2c0] sm:$0xff]
  %v435 = vld [vmem:[%s3 + $0x2c8] sm:$0xff]
  %v436 = vld [vmem:[%s3 + $0x2d0] sm:$0xff]
  %v437 = vld [vmem:[%s3 + $0x2d8] sm:$0xff]
  %v438 = vld [vmem:[%s3 + $0x2e0] sm:$0xff]
  %v439 = vld [vmem:[%s3 + $0x2e8] sm:$0xff]
  %v440 = vld [vmem:[%s3 + $0x2f0] sm:$0xff]
  %v441 = vld [vmem:[%s3 + $0x2f8] sm:$0xff]
  %v442 = vld [vmem:[%s3 + $0x300] sm:$0xff]
  %v443 = vld [vmem:[%s3 + $0x308] sm:$0xff]
  %v444 = vld [vmem:[%s3 + $0x310] sm:$0xff]
  %v445 = vld [vmem:[%s3 + $0x318] sm:$0xff]
  %v446 = vld [vmem:[%s3 + $0x320] sm:$0xff]
  %v447 = vld [vmem:[%s3 + $0x328] sm:$0xff]
  %v448 = vld [vmem:[%s3 + $0x330] sm:$0xff]
  %v449 = vld [vmem:[%s3 + $0x338] sm:$0xff]
  %v450 = vld [vmem:[%s3 + $0x340] sm:$0xff]
  %v451 = vld [vmem:[%s3 + $0x348] sm:$0xff]
  %v452 = vld [vmem:[%s3 + $0x350] sm:$0xff]
  %v453 = vld [vmem:[%s3 + $0x358] sm:$0xff]
  %v454 = vld [vmem:[%s3 + $0x360] sm:$0xff]
  %v455 = vld [vmem:[%s3 + $0x368] sm:$0xff]
  %v456 = vld [vmem:[%s3 + $0x370] sm:$0xff]
  %v457 = vld [vmem:[%s3 + $0x378] sm:$0xff]
  %v458 = vld [vmem:[%s3 + $0x380] sm:$0xff]
  %v459 = vld [vmem:[%s3 + $0x388] sm:$0xff]
  %v460 = vld [vmem:[%s3 + $0x390] sm:$0xff]
  %v461 = vld [vmem:[%s3 + $0x398] sm:$0xff]
  %v462 = vld [vmem:[%s3 + $0x3a0] sm:$0xff]
  %v463 = vld [vmem:[%s3 + $0x3a8] sm:$0xff]
  %v464 = vld [vmem:[%s3 + $0x3b0] sm:$0xff]
  %v465 = vld [vmem:[%s3 + $0x3b8] sm:$0xff]
  %v466 = vld [vmem:[%s3 + $0x3c0] sm:$0xff]
  %v467 = vld [vmem:[%s3 + $0x3c8] sm:$0xff]
  %v468 = vld [vmem:[%s3 + $0x3d0] sm:$0xff]
  %v469 = vld [vmem:[%s3 + $0x3d8] sm:$0xff]
  %v470 = vld [vmem:[%s3 + $0x3e0] sm:$0xff]
  %v471 = vld [vmem:[%s3 + $0x3e8] sm:$0xff]
  %v472 = vld [vmem:[%s3 + $0x3f0] sm:$0xff]
  %v473 = vld [vmem:[%s3 + $0x3f8] sm:$0xff]
  %v474 = vld [vmem:[%s4] sm:$0xf]
  %v476 = vlaneseq
  %v477 = vshrl.u32 %v476, 7
  %v478 = vsub.s32 0, %v477
  %v479 = vrot.slane %v474, %v478
  %v480 = vlaneseq
  %v481 = vshrl.u32 %v480, 7
  %v482 = vsub.s32 1, %v481
  %v483 = vrot.slane %v474, %v482
  %v484 = vlaneseq
  %v485 = vshrl.u32 %v484, 7
  %v486 = vsub.s32 2, %v485
  %v487 = vrot.slane %v474, %v486
  %v488 = vlaneseq
  %v489 = vshrl.u32 %v488, 7
  %v490 = vsub.s32 3, %v489
  %v491 = vrot.slane %v474, %v490
  %v624 = vunpack.c.l.b16 %v346
  %v625 = vunpack.c.h.b16 %v346
  %v626 = vunpack.c.l.b16 %v347
  %v627 = vunpack.c.h.b16 %v347
  %v628 = vunpack.c.l.b16 %v348
  %v629 = vunpack.c.h.b16 %v348
  %v630 = vunpack.c.l.b16 %v349
  %v631 = vunpack.c.h.b16 %v349
  %v632 = vunpack.c.l.b16 %v350
  %v633 = vunpack.c.h.b16 %v350
  %v634 = vunpack.c.l.b16 %v351
  %v635 = vunpack.c.h.b16 %v351
  %v636 = vunpack.c.l.b16 %v352
  %v637 = vunpack.c.h.b16 %v352
  %v638 = vunpack.c.l.b16 %v353
  %v639 = vunpack.c.h.b16 %v353
  %v640 = vunpack.c.l.b16 %v354
  %v641 = vunpack.c.h.b16 %v354
  %v642 = vunpack.c.l.b16 %v355
  %v643 = vunpack.c.h.b16 %v355
  %v644 = vunpack.c.l.b16 %v356
  %v645 = vunpack.c.h.b16 %v356
  %v646 = vunpack.c.l.b16 %v357
  %v647 = vunpack.c.h.b16 %v357
  %v648 = vunpack.c.l.b16 %v358
  %v649 = vunpack.c.h.b16 %v358
  %v650 = vunpack.c.l.b16 %v359
  %v651 = vunpack.c.h.b16 %v359
  %v652 = vunpack.c.l.b16 %v360
  %v653 = vunpack.c.h.b16 %v360
  %v654 = vunpack.c.l.b16 %v361
  %v655 = vunpack.c.h.b16 %v361
  %v656 = vunpack.c.l.b16 %v362
  %v657 = vunpack.c.h.b16 %v362
  %v658 = vunpack.c.l.b16 %v363
  %v659 = vunpack.c.h.b16 %v363
  %v660 = vunpack.c.l.b16 %v364
  %v661 = vunpack.c.h.b16 %v364
  %v662 = vunpack.c.l.b16 %v365
  %v663 = vunpack.c.h.b16 %v365
  %v664 = vunpack.c.l.b16 %v366
  %v665 = vunpack.c.h.b16 %v366
  %v666 = vunpack.c.l.b16 %v367
  %v667 = vunpack.c.h.b16 %v367
  %v668 = vunpack.c.l.b16 %v368
  %v669 = vunpack.c.h.b16 %v368
  %v670 = vunpack.c.l.b16 %v369
  %v671 = vunpack.c.h.b16 %v369
  %v672 = vunpack.c.l.b16 %v370
  %v673 = vunpack.c.h.b16 %v370
  %v674 = vunpack.c.l.b16 %v371
  %v675 = vunpack.c.h.b16 %v371
  %v676 = vunpack.c.l.b16 %v372
  %v677 = vunpack.c.h.b16 %v372
  %v678 = vunpack.c.l.b16 %v373
  %v679 = vunpack.c.h.b16 %v373
  %v680 = vunpack.c.l.b16 %v374
  %v681 = vunpack.c.h.b16 %v374
  %v682 = vunpack.c.l.b16 %v375
  %v683 = vunpack.c.h.b16 %v375
  %v684 = vunpack.c.l.b16 %v376
  %v685 = vunpack.c.h.b16 %v376
  %v686 = vunpack.c.l.b16 %v377
  %v687 = vunpack.c.h.b16 %v377
  %v688 = vunpack.c.l.b16 %v378
  %v689 = vunpack.c.h.b16 %v378
  %v690 = vunpack.c.l.b16 %v379
  %v691 = vunpack.c.h.b16 %v379
  %v692 = vunpack.c.l.b16 %v380
  %v693 = vunpack.c.h.b16 %v380
  %v694 = vunpack.c.l.b16 %v381
  %v695 = vunpack.c.h.b16 %v381
  %v696 = vunpack.c.l.b16 %v382
  %v697 = vunpack.c.h.b16 %v382
  %v698 = vunpack.c.l.b16 %v383
  %v699 = vunpack.c.h.b16 %v383
  %v700 = vunpack.c.l.b16 %v384
  %v701 = vunpack.c.h.b16 %v384
  %v702 = vunpack.c.l.b16 %v385
  %v703 = vunpack.c.h.b16 %v385
  %v704 = vunpack.c.l.b16 %v386
  %v705 = vunpack.c.h.b16 %v386
  %v706 = vunpack.c.l.b16 %v387
  %v707 = vunpack.c.h.b16 %v387
  %v708 = vunpack.c.l.b16 %v388
  %v709 = vunpack.c.h.b16 %v388
  %v710 = vunpack.c.l.b16 %v389
  %v711 = vunpack.c.h.b16 %v389
  %v712 = vunpack.c.l.b16 %v390
  %v713 = vunpack.c.h.b16 %v390
  %v714 = vunpack.c.l.b16 %v391
  %v715 = vunpack.c.h.b16 %v391
  %v716 = vunpack.c.l.b16 %v392
  %v717 = vunpack.c.h.b16 %v392
  %v718 = vunpack.c.l.b16 %v393
  %v719 = vunpack.c.h.b16 %v393
  %v720 = vunpack.c.l.b16 %v394
  %v721 = vunpack.c.h.b16 %v394
  %v722 = vunpack.c.l.b16 %v395
  %v723 = vunpack.c.h.b16 %v395
  %v724 = vunpack.c.l.b16 %v396
  %v725 = vunpack.c.h.b16 %v396
  %v726 = vunpack.c.l.b16 %v397
  %v727 = vunpack.c.h.b16 %v397
  %v728 = vunpack.c.l.b16 %v398
  %v729 = vunpack.c.h.b16 %v398
  %v730 = vunpack.c.l.b16 %v399
  %v731 = vunpack.c.h.b16 %v399
  %v732 = vunpack.c.l.b16 %v400
  %v733 = vunpack.c.h.b16 %v400
  %v734 = vunpack.c.l.b16 %v401
  %v735 = vunpack.c.h.b16 %v401
  %v736 = vunpack.c.l.b16 %v402
  %v737 = vunpack.c.h.b16 %v402
  %v738 = vunpack.c.l.b16 %v403
  %v739 = vunpack.c.h.b16 %v403
  %v740 = vunpack.c.l.b16 %v404
  %v741 = vunpack.c.h.b16 %v404
  %v742 = vunpack.c.l.b16 %v405
  %v743 = vunpack.c.h.b16 %v405
  %v744 = vunpack.c.l.b16 %v406
  %v745 = vunpack.c.h.b16 %v406
  %v746 = vunpack.c.l.b16 %v407
  %v747 = vunpack.c.h.b16 %v407
  %v748 = vunpack.c.l.b16 %v408
  %v749 = vunpack.c.h.b16 %v408
  %v750 = vunpack.c.l.b16 %v409
  %v751 = vunpack.c.h.b16 %v409
  %v752 = vunpack.c.l.b16 %v410
  %v753 = vunpack.c.h.b16 %v410
  %v754 = vunpack.c.l.b16 %v411
  %v755 = vunpack.c.h.b16 %v411
  %v756 = vunpack.c.l.b16 %v412
  %v757 = vunpack.c.h.b16 %v412
  %v758 = vunpack.c.l.b16 %v413
  %v759 = vunpack.c.h.b16 %v413
  %v760 = vunpack.c.l.b16 %v414
  %v761 = vunpack.c.h.b16 %v414
  %v762 = vunpack.c.l.b16 %v415
  %v763 = vunpack.c.h.b16 %v415
  %v764 = vunpack.c.l.b16 %v416
  %v765 = vunpack.c.h.b16 %v416
  %v766 = vunpack.c.l.b16 %v417
  %v767 = vunpack.c.h.b16 %v417
  %v768 = vunpack.c.l.b16 %v418
  %v769 = vunpack.c.h.b16 %v418
  %v770 = vunpack.c.l.b16 %v419
  %v771 = vunpack.c.h.b16 %v419
  %v772 = vunpack.c.l.b16 %v420
  %v773 = vunpack.c.h.b16 %v420
  %v774 = vunpack.c.l.b16 %v421
  %v775 = vunpack.c.h.b16 %v421
  %v776 = vunpack.c.l.b16 %v422
  %v777 = vunpack.c.h.b16 %v422
  %v778 = vunpack.c.l.b16 %v423
  %v779 = vunpack.c.h.b16 %v423
  %v780 = vunpack.c.l.b16 %v424
  %v781 = vunpack.c.h.b16 %v424
  %v782 = vunpack.c.l.b16 %v425
  %v783 = vunpack.c.h.b16 %v425
  %v784 = vunpack.c.l.b16 %v426
  %v785 = vunpack.c.h.b16 %v426
  %v786 = vunpack.c.l.b16 %v427
  %v787 = vunpack.c.h.b16 %v427
  %v788 = vunpack.c.l.b16 %v428
  %v789 = vunpack.c.h.b16 %v428
  %v790 = vunpack.c.l.b16 %v429
  %v791 = vunpack.c.h.b16 %v429
  %v792 = vunpack.c.l.b16 %v430
  %v793 = vunpack.c.h.b16 %v430
  %v794 = vunpack.c.l.b16 %v431
  %v795 = vunpack.c.h.b16 %v431
  %v796 = vunpack.c.l.b16 %v432
  %v797 = vunpack.c.h.b16 %v432
  %v798 = vunpack.c.l.b16 %v433
  %v799 = vunpack.c.h.b16 %v433
  %v800 = vunpack.c.l.b16 %v434
  %v801 = vunpack.c.h.b16 %v434
  %v802 = vunpack.c.l.b16 %v435
  %v803 = vunpack.c.h.b16 %v435
  %v804 = vunpack.c.l.b16 %v436
  %v805 = vunpack.c.h.b16 %v436
  %v806 = vunpack.c.l.b16 %v437
  %v807 = vunpack.c.h.b16 %v437
  %v808 = vunpack.c.l.b16 %v438
  %v809 = vunpack.c.h.b16 %v438
  %v810 = vunpack.c.l.b16 %v439
  %v811 = vunpack.c.h.b16 %v439
  %v812 = vunpack.c.l.b16 %v440
  %v813 = vunpack.c.h.b16 %v440
  %v814 = vunpack.c.l.b16 %v441
  %v815 = vunpack.c.h.b16 %v441
  %v816 = vunpack.c.l.b16 %v442
  %v817 = vunpack.c.h.b16 %v442
  %v818 = vunpack.c.l.b16 %v443
  %v819 = vunpack.c.h.b16 %v443
  %v820 = vunpack.c.l.b16 %v444
  %v821 = vunpack.c.h.b16 %v444
  %v822 = vunpack.c.l.b16 %v445
  %v823 = vunpack.c.h.b16 %v445
  %v824 = vunpack.c.l.b16 %v446
  %v825 = vunpack.c.h.b16 %v446
  %v826 = vunpack.c.l.b16 %v447
  %v827 = vunpack.c.h.b16 %v447
  %v828 = vunpack.c.l.b16 %v448
  %v829 = vunpack.c.h.b16 %v448
  %v830 = vunpack.c.l.b16 %v449
  %v831 = vunpack.c.h.b16 %v449
  %v832 = vunpack.c.l.b16 %v450
  %v833 = vunpack.c.h.b16 %v450
  %v834 = vunpack.c.l.b16 %v451
  %v835 = vunpack.c.h.b16 %v451
  %v836 = vunpack.c.l.b16 %v452
  %v837 = vunpack.c.h.b16 %v452
  %v838 = vunpack.c.l.b16 %v453
  %v839 = vunpack.c.h.b16 %v453
  %v840 = vunpack.c.l.b16 %v454
  %v841 = vunpack.c.h.b16 %v454
  %v842 = vunpack.c.l.b16 %v455
  %v843 = vunpack.c.h.b16 %v455
  %v844 = vunpack.c.l.b16 %v456
  %v845 = vunpack.c.h.b16 %v456
  %v846 = vunpack.c.l.b16 %v457
  %v847 = vunpack.c.h.b16 %v457
  %v848 = vunpack.c.l.b16 %v458
  %v849 = vunpack.c.h.b16 %v458
  %v850 = vunpack.c.l.b16 %v459
  %v851 = vunpack.c.h.b16 %v459
  %v852 = vunpack.c.l.b16 %v460
  %v853 = vunpack.c.h.b16 %v460
  %v854 = vunpack.c.l.b16 %v461
  %v855 = vunpack.c.h.b16 %v461
  %v856 = vunpack.c.l.b16 %v462
  %v857 = vunpack.c.h.b16 %v462
  %v858 = vunpack.c.l.b16 %v463
  %v859 = vunpack.c.h.b16 %v463
  %v860 = vunpack.c.l.b16 %v464
  %v861 = vunpack.c.h.b16 %v464
  %v862 = vunpack.c.l.b16 %v465
  %v863 = vunpack.c.h.b16 %v465
  %v864 = vunpack.c.l.b16 %v466
  %v865 = vunpack.c.h.b16 %v466
  %v866 = vunpack.c.l.b16 %v467
  %v867 = vunpack.c.h.b16 %v467
  %v868 = vunpack.c.l.b16 %v468
  %v869 = vunpack.c.h.b16 %v468
  %v870 = vunpack.c.l.b16 %v469
  %v871 = vunpack.c.h.b16 %v469
  %v872 = vunpack.c.l.b16 %v470
  %v873 = vunpack.c.h.b16 %v470
  %v874 = vunpack.c.l.b16 %v471
  %v875 = vunpack.c.h.b16 %v471
  %v876 = vunpack.c.l.b16 %v472
  %v877 = vunpack.c.h.b16 %v472
  %v878 = vunpack.c.l.b16 %v473
  %v879 = vunpack.c.h.b16 %v473
  %v880 = vpack.c.b16 %v628, %v624
  %v881 = vpack.c.b16 %v629, %v625
  %v882 = vpack.c.b16 %v630, %v626
  %v883 = vpack.c.b16 %v631, %v627
  %v884 = vpack.c.b16 %v636, %v632
  %v885 = vpack.c.b16 %v637, %v633
  %v886 = vpack.c.b16 %v638, %v634
  %v887 = vpack.c.b16 %v639, %v635
  %v888 = vpack.c.b16 %v644, %v640
  %v889 = vpack.c.b16 %v645, %v641
  %v890 = vpack.c.b16 %v646, %v642
  %v891 = vpack.c.b16 %v647, %v643
  %v892 = vpack.c.b16 %v652, %v648
  %v893 = vpack.c.b16 %v653, %v649
  %v894 = vpack.c.b16 %v654, %v650
  %v895 = vpack.c.b16 %v655, %v651
  %v896 = vpack.c.b16 %v660, %v656
  %v897 = vpack.c.b16 %v661, %v657
  %v898 = vpack.c.b16 %v662, %v658
  %v899 = vpack.c.b16 %v663, %v659
  %v900 = vpack.c.b16 %v668, %v664
  %v901 = vpack.c.b16 %v669, %v665
  %v902 = vpack.c.b16 %v670, %v666
  %v903 = vpack.c.b16 %v671, %v667
  %v904 = vpack.c.b16 %v676, %v672
  %v905 = vpack.c.b16 %v677, %v673
  %v906 = vpack.c.b16 %v678, %v674
  %v907 = vpack.c.b16 %v679, %v675
  %v908 = vpack.c.b16 %v684, %v680
  %v909 = vpack.c.b16 %v685, %v681
  %v910 = vpack.c.b16 %v686, %v682
  %v911 = vpack.c.b16 %v687, %v683
  %v912 = vpack.c.b16 %v692, %v688
  %v913 = vpack.c.b16 %v693, %v689
  %v914 = vpack.c.b16 %v694, %v690
  %v915 = vpack.c.b16 %v695, %v691
  %v916 = vpack.c.b16 %v700, %v696
  %v917 = vpack.c.b16 %v701, %v697
  %v918 = vpack.c.b16 %v702, %v698
  %v919 = vpack.c.b16 %v703, %v699
  %v920 = vpack.c.b16 %v708, %v704
  %v921 = vpack.c.b16 %v709, %v705
  %v922 = vpack.c.b16 %v710, %v706
  %v923 = vpack.c.b16 %v711, %v707
  %v924 = vpack.c.b16 %v716, %v712
  %v925 = vpack.c.b16 %v717, %v713
  %v926 = vpack.c.b16 %v718, %v714
  %v927 = vpack.c.b16 %v719, %v715
  %v928 = vpack.c.b16 %v724, %v720
  %v929 = vpack.c.b16 %v725, %v721
  %v930 = vpack.c.b16 %v726, %v722
  %v931 = vpack.c.b16 %v727, %v723
  %v932 = vpack.c.b16 %v732, %v728
  %v933 = vpack.c.b16 %v733, %v729
  %v934 = vpack.c.b16 %v734, %v730
  %v935 = vpack.c.b16 %v735, %v731
  %v936 = vpack.c.b16 %v740, %v736
  %v937 = vpack.c.b16 %v741, %v737
  %v938 = vpack.c.b16 %v742, %v738
  %v939 = vpack.c.b16 %v743, %v739
  %v940 = vpack.c.b16 %v748, %v744
  %v941 = vpack.c.b16 %v749, %v745
  %v942 = vpack.c.b16 %v750, %v746
  %v943 = vpack.c.b16 %v751, %v747
  %v944 = vpack.c.b16 %v756, %v752
  %v945 = vpack.c.b16 %v757, %v753
  %v946 = vpack.c.b16 %v758, %v754
  %v947 = vpack.c.b16 %v759, %v755
  %v948 = vpack.c.b16 %v764, %v760
  %v949 = vpack.c.b16 %v765, %v761
  %v950 = vpack.c.b16 %v766, %v762
  %v951 = vpack.c.b16 %v767, %v763
  %v952 = vpack.c.b16 %v772, %v768
  %v953 = vpack.c.b16 %v773, %v769
  %v954 = vpack.c.b16 %v774, %v770
  %v955 = vpack.c.b16 %v775, %v771
  %v956 = vpack.c.b16 %v780, %v776
  %v957 = vpack.c.b16 %v781, %v777
  %v958 = vpack.c.b16 %v782, %v778
  %v959 = vpack.c.b16 %v783, %v779
  %v960 = vpack.c.b16 %v788, %v784
  %v961 = vpack.c.b16 %v789, %v785
  %v962 = vpack.c.b16 %v790, %v786
  %v963 = vpack.c.b16 %v791, %v787
  %v964 = vpack.c.b16 %v796, %v792
  %v965 = vpack.c.b16 %v797, %v793
  %v966 = vpack.c.b16 %v798, %v794
  %v967 = vpack.c.b16 %v799, %v795
  %v968 = vpack.c.b16 %v804, %v800
  %v969 = vpack.c.b16 %v805, %v801
  %v970 = vpack.c.b16 %v806, %v802
  %v971 = vpack.c.b16 %v807, %v803
  %v972 = vpack.c.b16 %v812, %v808
  %v973 = vpack.c.b16 %v813, %v809
  %v974 = vpack.c.b16 %v814, %v810
  %v975 = vpack.c.b16 %v815, %v811
  %v976 = vpack.c.b16 %v820, %v816
  %v977 = vpack.c.b16 %v821, %v817
  %v978 = vpack.c.b16 %v822, %v818
  %v979 = vpack.c.b16 %v823, %v819
  %v980 = vpack.c.b16 %v828, %v824
  %v981 = vpack.c.b16 %v829, %v825
  %v982 = vpack.c.b16 %v830, %v826
  %v983 = vpack.c.b16 %v831, %v827
  %v984 = vpack.c.b16 %v836, %v832
  %v985 = vpack.c.b16 %v837, %v833
  %v986 = vpack.c.b16 %v838, %v834
  %v987 = vpack.c.b16 %v839, %v835
  %v988 = vpack.c.b16 %v844, %v840
  %v989 = vpack.c.b16 %v845, %v841
  %v990 = vpack.c.b16 %v846, %v842
  %v991 = vpack.c.b16 %v847, %v843
  %v992 = vpack.c.b16 %v852, %v848
  %v993 = vpack.c.b16 %v853, %v849
  %v994 = vpack.c.b16 %v854, %v850
  %v995 = vpack.c.b16 %v855, %v851
  %v996 = vpack.c.b16 %v860, %v856
  %v997 = vpack.c.b16 %v861, %v857
  %v998 = vpack.c.b16 %v862, %v858
  %v999 = vpack.c.b16 %v863, %v859
  %v1000 = vpack.c.b16 %v868, %v864
  %v1001 = vpack.c.b16 %v869, %v865
  %v1002 = vpack.c.b16 %v870, %v866
  %v1003 = vpack.c.b16 %v871, %v867
  %v1004 = vpack.c.b16 %v876, %v872
  %v1005 = vpack.c.b16 %v877, %v873
  %v1006 = vpack.c.b16 %v878, %v874
  %v1007 = vpack.c.b16 %v879, %v875
  %1136 = vmatprep.subr.bf16.mxu0 %v909
  %1137 = vmatpush1.bf16.msra.mxu0 %v908
  %1138 = vmatprep.subr.bf16.mxu0 %v905
  %1139 = vmatpush1.bf16.msra.mxu0 %v904
  %1140 = vmatprep.subr.bf16.mxu0 %v901
  %1141 = vmatpush1.bf16.msra.mxu0 %v900
  %1142 = vmatprep.subr.bf16.mxu0 %v897
  %1143 = vmatpush1.bf16.msra.mxu0 %v896
  %1144 = vmatprep.subr.bf16.mxu0 %v893
  %1145 = vmatpush1.bf16.msra.mxu0 %v892
  %1146 = vmatprep.subr.bf16.mxu0 %v889
  %1147 = vmatpush1.bf16.msra.mxu0 %v888
  %1148 = vmatprep.subr.bf16.mxu0 %v885
  %1149 = vmatpush1.bf16.msra.mxu0 %v884
  %1150 = vmatprep.subr.bf16.mxu0 %v881
  %1151 = vmatpush1.bf16.msra.mxu0 %v880
  %1152 = vmatprep.subr.bf16.mxu0 %v941
  %1153 = vmatpush2.bf16.msra.mxu0 %v940
  %1154 = vmatprep.subr.bf16.mxu0 %v937
  %1155 = vmatpush2.bf16.msra.mxu0 %v936
  %1156 = vmatprep.subr.bf16.mxu0 %v933
  %1157 = vmatpush2.bf16.msra.mxu0 %v932
  %1158 = vmatprep.subr.bf16.mxu0 %v929
  %1159 = vmatpush2.bf16.msra.mxu0 %v928
  %1160 = vmatprep.subr.bf16.mxu0 %v925
  %1161 = vmatpush2.bf16.msra.mxu0 %v924
  %1162 = vmatprep.subr.bf16.mxu0 %v921
  %1163 = vmatpush2.bf16.msra.mxu0 %v920
  %1164 = vmatprep.subr.bf16.mxu0 %v917
  %1165 = vmatpush2.bf16.msra.mxu0 %v916
  %1166 = vmatprep.subr.bf16.mxu0 %v913
  %1167 = vmatpush2.bf16.msra.mxu0 %v912
  %1168 = vmatprep.mubr.bf16.mxu0 %v343
  %1169 = vmatmul.mubr.bf16.gmra.mxu0 %v342
  %v1170 = vpop.f32.mrf.mxu0
  %v1171 = vadd.f32 %v479, %v1170
  %v1172 = vpop.f32.mrf.mxu0
  %v1173 = vadd.f32 %v483, %v1172
  %v1174 = vpop.f32.mrf.mxu0
  %v1175 = vpop.f32.mrf.mxu0
  %1176 = vdwg.mxu0
  %1177 = vmatprep.subr.bf16.mxu0 %v973
  %1178 = vmatpush1.bf16.msra.mxu0 %v972
  %1179 = vmatprep.subr.bf16.mxu0 %v969
  %1180 = vmatpush1.bf16.msra.mxu0 %v968
  %1181 = vmatprep.subr.bf16.mxu0 %v965
  %1182 = vmatpush1.bf16.msra.mxu0 %v964
  %1183 = vmatprep.subr.bf16.mxu0 %v961
  %1184 = vmatpush1.bf16.msra.mxu0 %v960
  %1185 = vmatprep.subr.bf16.mxu0 %v957
  %1186 = vmatpush1.bf16.msra.mxu0 %v956
  %1187 = vmatprep.subr.bf16.mxu0 %v953
  %1188 = vmatpush1.bf16.msra.mxu0 %v952
  %1189 = vmatprep.subr.bf16.mxu0 %v949
  %1190 = vmatpush1.bf16.msra.mxu0 %v948
  %1191 = vmatprep.subr.bf16.mxu0 %v945
  %1192 = vmatpush1.bf16.msra.mxu0 %v944
  %1193 = vmatprep.subr.bf16.mxu0 %v1005
  %1194 = vmatpush2.bf16.msra.mxu0 %v1004
  %1195 = vmatprep.subr.bf16.mxu0 %v1001
  %1196 = vmatpush2.bf16.msra.mxu0 %v1000
  %1197 = vmatprep.subr.bf16.mxu0 %v997
  %1198 = vmatpush2.bf16.msra.mxu0 %v996
  %1199 = vmatprep.subr.bf16.mxu0 %v993
  %1200 = vmatpush2.bf16.msra.mxu0 %v992
  %1201 = vmatprep.subr.bf16.mxu0 %v989
  %1202 = vmatpush2.bf16.msra.mxu0 %v988
  %1203 = vmatprep.subr.bf16.mxu0 %v985
  %1204 = vmatpush2.bf16.msra.mxu0 %v984
  %1205 = vmatprep.subr.bf16.mxu0 %v981
  %1206 = vmatpush2.bf16.msra.mxu0 %v980
  %1207 = vmatprep.subr.bf16.mxu0 %v977
  %1208 = vmatpush2.bf16.msra.mxu0 %v976
  %1209 = vmatprep.mubr.bf16.mxu0 %v345
  %1210 = vmatmul.mubr.bf16.gmra.mxu0 %v344
  %v1211 = vpop.f32.mrf.mxu0
  %v1212 = vadd.f32 %v1171, %v1211
  %v1213 = vpop.f32.mrf.mxu0
  %v1214 = vadd.f32 %v1173, %v1213
  %v1215 = vpop.f32.mrf.mxu0
  %v1216 = vpop.f32.mrf.mxu0
  %1217 = vdwg.mxu0
  %1218 = vmatprep.subr.bf16.mxu0 %v911
  %1219 = vmatpush1.bf16.msra.mxu0 %v910
  %1220 = vmatprep.subr.bf16.mxu0 %v907
  %1221 = vmatpush1.bf16.msra.mxu0 %v906
  %1222 = vmatprep.subr.bf16.mxu0 %v903
  %1223 = vmatpush1.bf16.msra.mxu0 %v902
  %1224 = vmatprep.subr.bf16.mxu0 %v899
  %1225 = vmatpush1.bf16.msra.mxu0 %v898
  %1226 = vmatprep.subr.bf16.mxu0 %v895
  %1227 = vmatpush1.bf16.msra.mxu0 %v894
  %1228 = vmatprep.subr.bf16.mxu0 %v891
  %1229 = vmatpush1.bf16.msra.mxu0 %v890
  %1230 = vmatprep.subr.bf16.mxu0 %v887
  %1231 = vmatpush1.bf16.msra.mxu0 %v886
  %1232 = vmatprep.subr.bf16.mxu0 %v883
  %1233 = vmatpush1.bf16.msra.mxu0 %v882
  %1234 = vmatprep.subr.bf16.mxu0 %v943
  %1235 = vmatpush2.bf16.msra.mxu0 %v942
  %1236 = vmatprep.subr.bf16.mxu0 %v939
  %1237 = vmatpush2.bf16.msra.mxu0 %v938
  %1238 = vmatprep.subr.bf16.mxu0 %v935
  %1239 = vmatpush2.bf16.msra.mxu0 %v934
  %1240 = vmatprep.subr.bf16.mxu0 %v931
  %1241 = vmatpush2.bf16.msra.mxu0 %v930
  %1242 = vmatprep.subr.bf16.mxu0 %v927
  %1243 = vmatpush2.bf16.msra.mxu0 %v926
  %1244 = vmatprep.subr.bf16.mxu0 %v923
  %1245 = vmatpush2.bf16.msra.mxu0 %v922
  %1246 = vmatprep.subr.bf16.mxu0 %v919
  %1247 = vmatpush2.bf16.msra.mxu0 %v918
  %1248 = vmatprep.subr.bf16.mxu0 %v915
  %1249 = vmatpush2.bf16.msra.mxu0 %v914
  %1250 = vmatprep.mubr.bf16.mxu0 %v343
  %1251 = vmatmul.mubr.bf16.gmra.mxu0 %v342
  %v1252 = vpop.f32.mrf.mxu0
  %v1253 = vadd.f32 %v487, %v1252
  %v1254 = vpop.f32.mrf.mxu0
  %v1255 = vadd.f32 %v491, %v1254
  %v1256 = vpop.f32.mrf.mxu0
  %v1257 = vpop.f32.mrf.mxu0
  %1258 = vdwg.mxu0
  %1259 = vmatprep.subr.bf16.mxu0 %v975
  %1260 = vmatpush1.bf16.msra.mxu0 %v974
  %1261 = vmatprep.subr.bf16.mxu0 %v971
  %1262 = vmatpush1.bf16.msra.mxu0 %v970
  %1263 = vmatprep.subr.bf16.mxu0 %v967
  %1264 = vmatpush1.bf16.msra.mxu0 %v966
  %1265 = vmatprep.subr.bf16.mxu0 %v963
  %1266 = vmatpush1.bf16.msra.mxu0 %v962
  %1267 = vmatprep.subr.bf16.mxu0 %v959
  %1268 = vmatpush1.bf16.msra.mxu0 %v958
  %1269 = vmatprep.subr.bf16.mxu0 %v955
  %1270 = vmatpush1.bf16.msra.mxu0 %v954
  %1271 = vmatprep.subr.bf16.mxu0 %v951
  %1272 = vmatpush1.bf16.msra.mxu0 %v950
  %1273 = vmatprep.subr.bf16.mxu0 %v947
  %1274 = vmatpush1.bf16.msra.mxu0 %v946
  %1275 = vmatprep.subr.bf16.mxu0 %v1007
  %1276 = vmatpush2.bf16.msra.mxu0 %v1006
  %1277 = vmatprep.subr.bf16.mxu0 %v1003
  %1278 = vmatpush2.bf16.msra.mxu0 %v1002
  %1279 = vmatprep.subr.bf16.mxu0 %v999
  %1280 = vmatpush2.bf16.msra.mxu0 %v998
  %1281 = vmatprep.subr.bf16.mxu0 %v995
  %1282 = vmatpush2.bf16.msra.mxu0 %v994
  %1283 = vmatprep.subr.bf16.mxu0 %v991
  %1284 = vmatpush2.bf16.msra.mxu0 %v990
  %1285 = vmatprep.subr.bf16.mxu0 %v987
  %1286 = vmatpush2.bf16.msra.mxu0 %v986
  %1287 = vmatprep.subr.bf16.mxu0 %v983
  %1288 = vmatpush2.bf16.msra.mxu0 %v982
  %1289 = vmatprep.subr.bf16.mxu0 %v979
  %1290 = vmatpush2.bf16.msra.mxu0 %v978
  %1291 = vmatprep.mubr.bf16.mxu0 %v345
  %1292 = vmatmul.mubr.bf16.gmra.mxu0 %v344
  %v1293 = vpop.f32.mrf.mxu0
  %v1294 = vadd.f32 %v1253, %v1293
  %v1295 = vpop.f32.mrf.mxu0
  %v1296 = vadd.f32 %v1255, %v1295
  %v1297 = vpop.f32.mrf.mxu0
  %v1298 = vpop.f32.mrf.mxu0
  %1299 = vdwg.mxu0
  %vm1300 = vcmp.gt.f32.partialorder %v1212, 0.0
  %vm1301 = vcmp.gt.f32.partialorder %v1214, 0.0
  %vm1302 = vcmp.gt.f32.partialorder %v1294, 0.0
  %vm1303 = vcmp.gt.f32.partialorder %v1296, 0.0
  %v1304 = vmul.f32 %v1212, 0.2
  %v1305 = vmul.f32 %v1214, 0.2
  %v1306 = vmul.f32 %v1294, 0.2
  %v1307 = vmul.f32 %v1296, 0.2
  %v1308 = vsel %vm1300, %v1212, %v1304
  %v1309 = vsel %vm1301, %v1214, %v1305
  %v1310 = vsel %vm1302, %v1294, %v1306
  %v1311 = vsel %vm1303, %v1296, %v1307
  %v1312 = vpack.c.bf16 %v1308, %v1308
  %v1313 = vpack.c.bf16 %v1309, %v1309
  %v1314 = vpack.c.bf16 %v1310, %v1310
  %v1315 = vpack.c.bf16 %v1311, %v1311
  %v1316 = vld [vmem:[%s5] sm:$0xff]
  %v1317 = vld [vmem:[%s5 + $0x8] sm:$0xff]
  %v1318 = vld [vmem:[%s5 + $0x10] sm:$0xff]
  %v1319 = vld [vmem:[%s5 + $0x18] sm:$0xff]
  %v1320 = vld [vmem:[%s5 + $0x20] sm:$0xff]
  %v1321 = vld [vmem:[%s5 + $0x28] sm:$0xff]
  %v1322 = vld [vmem:[%s5 + $0x30] sm:$0xff]
  %v1323 = vld [vmem:[%s5 + $0x38] sm:$0xff]
  %v1324 = vld [vmem:[%s5 + $0x40] sm:$0xff]
  %v1325 = vld [vmem:[%s5 + $0x48] sm:$0xff]
  %v1326 = vld [vmem:[%s5 + $0x50] sm:$0xff]
  %v1327 = vld [vmem:[%s5 + $0x58] sm:$0xff]
  %v1328 = vld [vmem:[%s5 + $0x60] sm:$0xff]
  %v1329 = vld [vmem:[%s5 + $0x68] sm:$0xff]
  %v1330 = vld [vmem:[%s5 + $0x70] sm:$0xff]
  %v1331 = vld [vmem:[%s5 + $0x78] sm:$0xff]
  %v1332 = vld [vmem:[%s5 + $0x80] sm:$0xff]
  %v1333 = vld [vmem:[%s5 + $0x88] sm:$0xff]
  %v1334 = vld [vmem:[%s5 + $0x90] sm:$0xff]
  %v1335 = vld [vmem:[%s5 + $0x98] sm:$0xff]
  %v1336 = vld [vmem:[%s5 + $0xa0] sm:$0xff]
  %v1337 = vld [vmem:[%s5 + $0xa8] sm:$0xff]
  %v1338 = vld [vmem:[%s5 + $0xb0] sm:$0xff]
  %v1339 = vld [vmem:[%s5 + $0xb8] sm:$0xff]
  %v1340 = vld [vmem:[%s5 + $0xc0] sm:$0xff]
  %v1341 = vld [vmem:[%s5 + $0xc8] sm:$0xff]
  %v1342 = vld [vmem:[%s5 + $0xd0] sm:$0xff]
  %v1343 = vld [vmem:[%s5 + $0xd8] sm:$0xff]
  %v1344 = vld [vmem:[%s5 + $0xe0] sm:$0xff]
  %v1345 = vld [vmem:[%s5 + $0xe8] sm:$0xff]
  %v1346 = vld [vmem:[%s5 + $0xf0] sm:$0xff]
  %v1347 = vld [vmem:[%s5 + $0xf8] sm:$0xff]
  %v1348 = vld [vmem:[%s5 + $0x100] sm:$0xff]
  %v1349 = vld [vmem:[%s5 + $0x108] sm:$0xff]
  %v1350 = vld [vmem:[%s5 + $0x110] sm:$0xff]
  %v1351 = vld [vmem:[%s5 + $0x118] sm:$0xff]
  %v1352 = vld [vmem:[%s5 + $0x120] sm:$0xff]
  %v1353 = vld [vmem:[%s5 + $0x128] sm:$0xff]
  %v1354 = vld [vmem:[%s5 + $0x130] sm:$0xff]
  %v1355 = vld [vmem:[%s5 + $0x138] sm:$0xff]
  %v1356 = vld [vmem:[%s5 + $0x140] sm:$0xff]
  %v1357 = vld [vmem:[%s5 + $0x148] sm:$0xff]
  %v1358 = vld [vmem:[%s5 + $0x150] sm:$0xff]
  %v1359 = vld [vmem:[%s5 + $0x158] sm:$0xff]
  %v1360 = vld [vmem:[%s5 + $0x160] sm:$0xff]
  %v1361 = vld [vmem:[%s5 + $0x168] sm:$0xff]
  %v1362 = vld [vmem:[%s5 + $0x170] sm:$0xff]
  %v1363 = vld [vmem:[%s5 + $0x178] sm:$0xff]
  %v1364 = vld [vmem:[%s5 + $0x180] sm:$0xff]
  %v1365 = vld [vmem:[%s5 + $0x188] sm:$0xff]
  %v1366 = vld [vmem:[%s5 + $0x190] sm:$0xff]
  %v1367 = vld [vmem:[%s5 + $0x198] sm:$0xff]
  %v1368 = vld [vmem:[%s5 + $0x1a0] sm:$0xff]
  %v1369 = vld [vmem:[%s5 + $0x1a8] sm:$0xff]
  %v1370 = vld [vmem:[%s5 + $0x1b0] sm:$0xff]
  %v1371 = vld [vmem:[%s5 + $0x1b8] sm:$0xff]
  %v1372 = vld [vmem:[%s5 + $0x1c0] sm:$0xff]
  %v1373 = vld [vmem:[%s5 + $0x1c8] sm:$0xff]
  %v1374 = vld [vmem:[%s5 + $0x1d0] sm:$0xff]
  %v1375 = vld [vmem:[%s5 + $0x1d8] sm:$0xff]
  %v1376 = vld [vmem:[%s5 + $0x1e0] sm:$0xff]
  %v1377 = vld [vmem:[%s5 + $0x1e8] sm:$0xff]
  %v1378 = vld [vmem:[%s5 + $0x1f0] sm:$0xff]
  %v1379 = vld [vmem:[%s5 + $0x1f8] sm:$0xff]
  %v1380 = vld [vmem:[%s5 + $0x200] sm:$0xff]
  %v1381 = vld [vmem:[%s5 + $0x208] sm:$0xff]
  %v1382 = vld [vmem:[%s5 + $0x210] sm:$0xff]
  %v1383 = vld [vmem:[%s5 + $0x218] sm:$0xff]
  %v1384 = vld [vmem:[%s5 + $0x220] sm:$0xff]
  %v1385 = vld [vmem:[%s5 + $0x228] sm:$0xff]
  %v1386 = vld [vmem:[%s5 + $0x230] sm:$0xff]
  %v1387 = vld [vmem:[%s5 + $0x238] sm:$0xff]
  %v1388 = vld [vmem:[%s5 + $0x240] sm:$0xff]
  %v1389 = vld [vmem:[%s5 + $0x248] sm:$0xff]
  %v1390 = vld [vmem:[%s5 + $0x250] sm:$0xff]
  %v1391 = vld [vmem:[%s5 + $0x258] sm:$0xff]
  %v1392 = vld [vmem:[%s5 + $0x260] sm:$0xff]
  %v1393 = vld [vmem:[%s5 + $0x268] sm:$0xff]
  %v1394 = vld [vmem:[%s5 + $0x270] sm:$0xff]
  %v1395 = vld [vmem:[%s5 + $0x278] sm:$0xff]
  %v1396 = vld [vmem:[%s5 + $0x280] sm:$0xff]
  %v1397 = vld [vmem:[%s5 + $0x288] sm:$0xff]
  %v1398 = vld [vmem:[%s5 + $0x290] sm:$0xff]
  %v1399 = vld [vmem:[%s5 + $0x298] sm:$0xff]
  %v1400 = vld [vmem:[%s5 + $0x2a0] sm:$0xff]
  %v1401 = vld [vmem:[%s5 + $0x2a8] sm:$0xff]
  %v1402 = vld [vmem:[%s5 + $0x2b0] sm:$0xff]
  %v1403 = vld [vmem:[%s5 + $0x2b8] sm:$0xff]
  %v1404 = vld [vmem:[%s5 + $0x2c0] sm:$0xff]
  %v1405 = vld [vmem:[%s5 + $0x2c8] sm:$0xff]
  %v1406 = vld [vmem:[%s5 + $0x2d0] sm:$0xff]
  %v1407 = vld [vmem:[%s5 + $0x2d8] sm:$0xff]
  %v1408 = vld [vmem:[%s5 + $0x2e0] sm:$0xff]
  %v1409 = vld [vmem:[%s5 + $0x2e8] sm:$0xff]
  %v1410 = vld [vmem:[%s5 + $0x2f0] sm:$0xff]
  %v1411 = vld [vmem:[%s5 + $0x2f8] sm:$0xff]
  %v1412 = vld [vmem:[%s5 + $0x300] sm:$0xff]
  %v1413 = vld [vmem:[%s5 + $0x308] sm:$0xff]
  %v1414 = vld [vmem:[%s5 + $0x310] sm:$0xff]
  %v1415 = vld [vmem:[%s5 + $0x318] sm:$0xff]
  %v1416 = vld [vmem:[%s5 + $0x320] sm:$0xff]
  %v1417 = vld [vmem:[%s5 + $0x328] sm:$0xff]
  %v1418 = vld [vmem:[%s5 + $0x330] sm:$0xff]
  %v1419 = vld [vmem:[%s5 + $0x338] sm:$0xff]
  %v1420 = vld [vmem:[%s5 + $0x340] sm:$0xff]
  %v1421 = vld [vmem:[%s5 + $0x348] sm:$0xff]
  %v1422 = vld [vmem:[%s5 + $0x350] sm:$0xff]
  %v1423 = vld [vmem:[%s5 + $0x358] sm:$0xff]
  %v1424 = vld [vmem:[%s5 + $0x360] sm:$0xff]
  %v1425 = vld [vmem:[%s5 + $0x368] sm:$0xff]
  %v1426 = vld [vmem:[%s5 + $0x370] sm:$0xff]
  %v1427 = vld [vmem:[%s5 + $0x378] sm:$0xff]
  %v1428 = vld [vmem:[%s5 + $0x380] sm:$0xff]
  %v1429 = vld [vmem:[%s5 + $0x388] sm:$0xff]
  %v1430 = vld [vmem:[%s5 + $0x390] sm:$0xff]
  %v1431 = vld [vmem:[%s5 + $0x398] sm:$0xff]
  %v1432 = vld [vmem:[%s5 + $0x3a0] sm:$0xff]
  %v1433 = vld [vmem:[%s5 + $0x3a8] sm:$0xff]
  %v1434 = vld [vmem:[%s5 + $0x3b0] sm:$0xff]
  %v1435 = vld [vmem:[%s5 + $0x3b8] sm:$0xff]
  %v1436 = vld [vmem:[%s5 + $0x3c0] sm:$0xff]
  %v1437 = vld [vmem:[%s5 + $0x3c8] sm:$0xff]
  %v1438 = vld [vmem:[%s5 + $0x3d0] sm:$0xff]
  %v1439 = vld [vmem:[%s5 + $0x3d8] sm:$0xff]
  %v1440 = vld [vmem:[%s5 + $0x3e0] sm:$0xff]
  %v1441 = vld [vmem:[%s5 + $0x3e8] sm:$0xff]
  %v1442 = vld [vmem:[%s5 + $0x3f0] sm:$0xff]
  %v1443 = vld [vmem:[%s5 + $0x3f8] sm:$0xff]
  %v1444 = vld [vmem:[%s6] sm:$0xf]
  %v1446 = vlaneseq
  %v1447 = vshrl.u32 %v1446, 7
  %v1448 = vsub.s32 0, %v1447
  %v1449 = vrot.slane %v1444, %v1448
  %v1450 = vlaneseq
  %v1451 = vshrl.u32 %v1450, 7
  %v1452 = vsub.s32 1, %v1451
  %v1453 = vrot.slane %v1444, %v1452
  %v1454 = vlaneseq
  %v1455 = vshrl.u32 %v1454, 7
  %v1456 = vsub.s32 2, %v1455
  %v1457 = vrot.slane %v1444, %v1456
  %v1458 = vlaneseq
  %v1459 = vshrl.u32 %v1458, 7
  %v1460 = vsub.s32 3, %v1459
  %v1461 = vrot.slane %v1444, %v1460
  %v1594 = vunpack.c.l.b16 %v1316
  %v1595 = vunpack.c.h.b16 %v1316
  %v1596 = vunpack.c.l.b16 %v1317
  %v1597 = vunpack.c.h.b16 %v1317
  %v1598 = vunpack.c.l.b16 %v1318
  %v1599 = vunpack.c.h.b16 %v1318
  %v1600 = vunpack.c.l.b16 %v1319
  %v1601 = vunpack.c.h.b16 %v1319
  %v1602 = vunpack.c.l.b16 %v1320
  %v1603 = vunpack.c.h.b16 %v1320
  %v1604 = vunpack.c.l.b16 %v1321
  %v1605 = vunpack.c.h.b16 %v1321
  %v1606 = vunpack.c.l.b16 %v1322
  %v1607 = vunpack.c.h.b16 %v1322
  %v1608 = vunpack.c.l.b16 %v1323
  %v1609 = vunpack.c.h.b16 %v1323
  %v1610 = vunpack.c.l.b16 %v1324
  %v1611 = vunpack.c.h.b16 %v1324
  %v1612 = vunpack.c.l.b16 %v1325
  %v1613 = vunpack.c.h.b16 %v1325
  %v1614 = vunpack.c.l.b16 %v1326
  %v1615 = vunpack.c.h.b16 %v1326
  %v1616 = vunpack.c.l.b16 %v1327
  %v1617 = vunpack.c.h.b16 %v1327
  %v1618 = vunpack.c.l.b16 %v1328
  %v1619 = vunpack.c.h.b16 %v1328
  %v1620 = vunpack.c.l.b16 %v1329
  %v1621 = vunpack.c.h.b16 %v1329
  %v1622 = vunpack.c.l.b16 %v1330
  %v1623 = vunpack.c.h.b16 %v1330
  %v1624 = vunpack.c.l.b16 %v1331
  %v1625 = vunpack.c.h.b16 %v1331
  %v1626 = vunpack.c.l.b16 %v1332
  %v1627 = vunpack.c.h.b16 %v1332
  %v1628 = vunpack.c.l.b16 %v1333
  %v1629 = vunpack.c.h.b16 %v1333
  %v1630 = vunpack.c.l.b16 %v1334
  %v1631 = vunpack.c.h.b16 %v1334
  %v1632 = vunpack.c.l.b16 %v1335
  %v1633 = vunpack.c.h.b16 %v1335
  %v1634 = vunpack.c.l.b16 %v1336
  %v1635 = vunpack.c.h.b16 %v1336
  %v1636 = vunpack.c.l.b16 %v1337
  %v1637 = vunpack.c.h.b16 %v1337
  %v1638 = vunpack.c.l.b16 %v1338
  %v1639 = vunpack.c.h.b16 %v1338
  %v1640 = vunpack.c.l.b16 %v1339
  %v1641 = vunpack.c.h.b16 %v1339
  %v1642 = vunpack.c.l.b16 %v1340
  %v1643 = vunpack.c.h.b16 %v1340
  %v1644 = vunpack.c.l.b16 %v1341
  %v1645 = vunpack.c.h.b16 %v1341
  %v1646 = vunpack.c.l.b16 %v1342
  %v1647 = vunpack.c.h.b16 %v1342
  %v1648 = vunpack.c.l.b16 %v1343
  %v1649 = vunpack.c.h.b16 %v1343
  %v1650 = vunpack.c.l.b16 %v1344
  %v1651 = vunpack.c.h.b16 %v1344
  %v1652 = vunpack.c.l.b16 %v1345
  %v1653 = vunpack.c.h.b16 %v1345
  %v1654 = vunpack.c.l.b16 %v1346
  %v1655 = vunpack.c.h.b16 %v1346
  %v1656 = vunpack.c.l.b16 %v1347
  %v1657 = vunpack.c.h.b16 %v1347
  %v1658 = vunpack.c.l.b16 %v1348
  %v1659 = vunpack.c.h.b16 %v1348
  %v1660 = vunpack.c.l.b16 %v1349
  %v1661 = vunpack.c.h.b16 %v1349
  %v1662 = vunpack.c.l.b16 %v1350
  %v1663 = vunpack.c.h.b16 %v1350
  %v1664 = vunpack.c.l.b16 %v1351
  %v1665 = vunpack.c.h.b16 %v1351
  %v1666 = vunpack.c.l.b16 %v1352
  %v1667 = vunpack.c.h.b16 %v1352
  %v1668 = vunpack.c.l.b16 %v1353
  %v1669 = vunpack.c.h.b16 %v1353
  %v1670 = vunpack.c.l.b16 %v1354
  %v1671 = vunpack.c.h.b16 %v1354
  %v1672 = vunpack.c.l.b16 %v1355
  %v1673 = vunpack.c.h.b16 %v1355
  %v1674 = vunpack.c.l.b16 %v1356
  %v1675 = vunpack.c.h.b16 %v1356
  %v1676 = vunpack.c.l.b16 %v1357
  %v1677 = vunpack.c.h.b16 %v1357
  %v1678 = vunpack.c.l.b16 %v1358
  %v1679 = vunpack.c.h.b16 %v1358
  %v1680 = vunpack.c.l.b16 %v1359
  %v1681 = vunpack.c.h.b16 %v1359
  %v1682 = vunpack.c.l.b16 %v1360
  %v1683 = vunpack.c.h.b16 %v1360
  %v1684 = vunpack.c.l.b16 %v1361
  %v1685 = vunpack.c.h.b16 %v1361
  %v1686 = vunpack.c.l.b16 %v1362
  %v1687 = vunpack.c.h.b16 %v1362
  %v1688 = vunpack.c.l.b16 %v1363
  %v1689 = vunpack.c.h.b16 %v1363
  %v1690 = vunpack.c.l.b16 %v1364
  %v1691 = vunpack.c.h.b16 %v1364
  %v1692 = vunpack.c.l.b16 %v1365
  %v1693 = vunpack.c.h.b16 %v1365
  %v1694 = vunpack.c.l.b16 %v1366
  %v1695 = vunpack.c.h.b16 %v1366
  %v1696 = vunpack.c.l.b16 %v1367
  %v1697 = vunpack.c.h.b16 %v1367
  %v1698 = vunpack.c.l.b16 %v1368
  %v1699 = vunpack.c.h.b16 %v1368
  %v1700 = vunpack.c.l.b16 %v1369
  %v1701 = vunpack.c.h.b16 %v1369
  %v1702 = vunpack.c.l.b16 %v1370
  %v1703 = vunpack.c.h.b16 %v1370
  %v1704 = vunpack.c.l.b16 %v1371
  %v1705 = vunpack.c.h.b16 %v1371
  %v1706 = vunpack.c.l.b16 %v1372
  %v1707 = vunpack.c.h.b16 %v1372
  %v1708 = vunpack.c.l.b16 %v1373
  %v1709 = vunpack.c.h.b16 %v1373
  %v1710 = vunpack.c.l.b16 %v1374
  %v1711 = vunpack.c.h.b16 %v1374
  %v1712 = vunpack.c.l.b16 %v1375
  %v1713 = vunpack.c.h.b16 %v1375
  %v1714 = vunpack.c.l.b16 %v1376
  %v1715 = vunpack.c.h.b16 %v1376
  %v1716 = vunpack.c.l.b16 %v1377
  %v1717 = vunpack.c.h.b16 %v1377
  %v1718 = vunpack.c.l.b16 %v1378
  %v1719 = vunpack.c.h.b16 %v1378
  %v1720 = vunpack.c.l.b16 %v1379
  %v1721 = vunpack.c.h.b16 %v1379
  %v1722 = vunpack.c.l.b16 %v1380
  %v1723 = vunpack.c.h.b16 %v1380
  %v1724 = vunpack.c.l.b16 %v1381
  %v1725 = vunpack.c.h.b16 %v1381
  %v1726 = vunpack.c.l.b16 %v1382
  %v1727 = vunpack.c.h.b16 %v1382
  %v1728 = vunpack.c.l.b16 %v1383
  %v1729 = vunpack.c.h.b16 %v1383
  %v1730 = vunpack.c.l.b16 %v1384
  %v1731 = vunpack.c.h.b16 %v1384
  %v1732 = vunpack.c.l.b16 %v1385
  %v1733 = vunpack.c.h.b16 %v1385
  %v1734 = vunpack.c.l.b16 %v1386
  %v1735 = vunpack.c.h.b16 %v1386
  %v1736 = vunpack.c.l.b16 %v1387
  %v1737 = vunpack.c.h.b16 %v1387
  %v1738 = vunpack.c.l.b16 %v1388
  %v1739 = vunpack.c.h.b16 %v1388
  %v1740 = vunpack.c.l.b16 %v1389
  %v1741 = vunpack.c.h.b16 %v1389
  %v1742 = vunpack.c.l.b16 %v1390
  %v1743 = vunpack.c.h.b16 %v1390
  %v1744 = vunpack.c.l.b16 %v1391
  %v1745 = vunpack.c.h.b16 %v1391
  %v1746 = vunpack.c.l.b16 %v1392
  %v1747 = vunpack.c.h.b16 %v1392
  %v1748 = vunpack.c.l.b16 %v1393
  %v1749 = vunpack.c.h.b16 %v1393
  %v1750 = vunpack.c.l.b16 %v1394
  %v1751 = vunpack.c.h.b16 %v1394
  %v1752 = vunpack.c.l.b16 %v1395
  %v1753 = vunpack.c.h.b16 %v1395
  %v1754 = vunpack.c.l.b16 %v1396
  %v1755 = vunpack.c.h.b16 %v1396
  %v1756 = vunpack.c.l.b16 %v1397
  %v1757 = vunpack.c.h.b16 %v1397
  %v1758 = vunpack.c.l.b16 %v1398
  %v1759 = vunpack.c.h.b16 %v1398
  %v1760 = vunpack.c.l.b16 %v1399
  %v1761 = vunpack.c.h.b16 %v1399
  %v1762 = vunpack.c.l.b16 %v1400
  %v1763 = vunpack.c.h.b16 %v1400
  %v1764 = vunpack.c.l.b16 %v1401
  %v1765 = vunpack.c.h.b16 %v1401
  %v1766 = vunpack.c.l.b16 %v1402
  %v1767 = vunpack.c.h.b16 %v1402
  %v1768 = vunpack.c.l.b16 %v1403
  %v1769 = vunpack.c.h.b16 %v1403
  %v1770 = vunpack.c.l.b16 %v1404
  %v1771 = vunpack.c.h.b16 %v1404
  %v1772 = vunpack.c.l.b16 %v1405
  %v1773 = vunpack.c.h.b16 %v1405
  %v1774 = vunpack.c.l.b16 %v1406
  %v1775 = vunpack.c.h.b16 %v1406
  %v1776 = vunpack.c.l.b16 %v1407
  %v1777 = vunpack.c.h.b16 %v1407
  %v1778 = vunpack.c.l.b16 %v1408
  %v1779 = vunpack.c.h.b16 %v1408
  %v1780 = vunpack.c.l.b16 %v1409
  %v1781 = vunpack.c.h.b16 %v1409
  %v1782 = vunpack.c.l.b16 %v1410
  %v1783 = vunpack.c.h.b16 %v1410
  %v1784 = vunpack.c.l.b16 %v1411
  %v1785 = vunpack.c.h.b16 %v1411
  %v1786 = vunpack.c.l.b16 %v1412
  %v1787 = vunpack.c.h.b16 %v1412
  %v1788 = vunpack.c.l.b16 %v1413
  %v1789 = vunpack.c.h.b16 %v1413
  %v1790 = vunpack.c.l.b16 %v1414
  %v1791 = vunpack.c.h.b16 %v1414
  %v1792 = vunpack.c.l.b16 %v1415
  %v1793 = vunpack.c.h.b16 %v1415
  %v1794 = vunpack.c.l.b16 %v1416
  %v1795 = vunpack.c.h.b16 %v1416
  %v1796 = vunpack.c.l.b16 %v1417
  %v1797 = vunpack.c.h.b16 %v1417
  %v1798 = vunpack.c.l.b16 %v1418
  %v1799 = vunpack.c.h.b16 %v1418
  %v1800 = vunpack.c.l.b16 %v1419
  %v1801 = vunpack.c.h.b16 %v1419
  %v1802 = vunpack.c.l.b16 %v1420
  %v1803 = vunpack.c.h.b16 %v1420
  %v1804 = vunpack.c.l.b16 %v1421
  %v1805 = vunpack.c.h.b16 %v1421
  %v1806 = vunpack.c.l.b16 %v1422
  %v1807 = vunpack.c.h.b16 %v1422
  %v1808 = vunpack.c.l.b16 %v1423
  %v1809 = vunpack.c.h.b16 %v1423
  %v1810 = vunpack.c.l.b16 %v1424
  %v1811 = vunpack.c.h.b16 %v1424
  %v1812 = vunpack.c.l.b16 %v1425
  %v1813 = vunpack.c.h.b16 %v1425
  %v1814 = vunpack.c.l.b16 %v1426
  %v1815 = vunpack.c.h.b16 %v1426
  %v1816 = vunpack.c.l.b16 %v1427
  %v1817 = vunpack.c.h.b16 %v1427
  %v1818 = vunpack.c.l.b16 %v1428
  %v1819 = vunpack.c.h.b16 %v1428
  %v1820 = vunpack.c.l.b16 %v1429
  %v1821 = vunpack.c.h.b16 %v1429
  %v1822 = vunpack.c.l.b16 %v1430
  %v1823 = vunpack.c.h.b16 %v1430
  %v1824 = vunpack.c.l.b16 %v1431
  %v1825 = vunpack.c.h.b16 %v1431
  %v1826 = vunpack.c.l.b16 %v1432
  %v1827 = vunpack.c.h.b16 %v1432
  %v1828 = vunpack.c.l.b16 %v1433
  %v1829 = vunpack.c.h.b16 %v1433
  %v1830 = vunpack.c.l.b16 %v1434
  %v1831 = vunpack.c.h.b16 %v1434
  %v1832 = vunpack.c.l.b16 %v1435
  %v1833 = vunpack.c.h.b16 %v1435
  %v1834 = vunpack.c.l.b16 %v1436
  %v1835 = vunpack.c.h.b16 %v1436
  %v1836 = vunpack.c.l.b16 %v1437
  %v1837 = vunpack.c.h.b16 %v1437
  %v1838 = vunpack.c.l.b16 %v1438
  %v1839 = vunpack.c.h.b16 %v1438
  %v1840 = vunpack.c.l.b16 %v1439
  %v1841 = vunpack.c.h.b16 %v1439
  %v1842 = vunpack.c.l.b16 %v1440
  %v1843 = vunpack.c.h.b16 %v1440
  %v1844 = vunpack.c.l.b16 %v1441
  %v1845 = vunpack.c.h.b16 %v1441
  %v1846 = vunpack.c.l.b16 %v1442
  %v1847 = vunpack.c.h.b16 %v1442
  %v1848 = vunpack.c.l.b16 %v1443
  %v1849 = vunpack.c.h.b16 %v1443
  %v1850 = vpack.c.b16 %v1598, %v1594
  %v1851 = vpack.c.b16 %v1599, %v1595
  %v1852 = vpack.c.b16 %v1600, %v1596
  %v1853 = vpack.c.b16 %v1601, %v1597
  %v1854 = vpack.c.b16 %v1606, %v1602
  %v1855 = vpack.c.b16 %v1607, %v1603
  %v1856 = vpack.c.b16 %v1608, %v1604
  %v1857 = vpack.c.b16 %v1609, %v1605
  %v1858 = vpack.c.b16 %v1614, %v1610
  %v1859 = vpack.c.b16 %v1615, %v1611
  %v1860 = vpack.c.b16 %v1616, %v1612
  %v1861 = vpack.c.b16 %v1617, %v1613
  %v1862 = vpack.c.b16 %v1622, %v1618
  %v1863 = vpack.c.b16 %v1623, %v1619
  %v1864 = vpack.c.b16 %v1624, %v1620
  %v1865 = vpack.c.b16 %v1625, %v1621
  %v1866 = vpack.c.b16 %v1630, %v1626
  %v1867 = vpack.c.b16 %v1631, %v1627
  %v1868 = vpack.c.b16 %v1632, %v1628
  %v1869 = vpack.c.b16 %v1633, %v1629
  %v1870 = vpack.c.b16 %v1638, %v1634
  %v1871 = vpack.c.b16 %v1639, %v1635
  %v1872 = vpack.c.b16 %v1640, %v1636
  %v1873 = vpack.c.b16 %v1641, %v1637
  %v1874 = vpack.c.b16 %v1646, %v1642
  %v1875 = vpack.c.b16 %v1647, %v1643
  %v1876 = vpack.c.b16 %v1648, %v1644
  %v1877 = vpack.c.b16 %v1649, %v1645
  %v1878 = vpack.c.b16 %v1654, %v1650
  %v1879 = vpack.c.b16 %v1655, %v1651
  %v1880 = vpack.c.b16 %v1656, %v1652
  %v1881 = vpack.c.b16 %v1657, %v1653
  %v1882 = vpack.c.b16 %v1662, %v1658
  %v1883 = vpack.c.b16 %v1663, %v1659
  %v1884 = vpack.c.b16 %v1664, %v1660
  %v1885 = vpack.c.b16 %v1665, %v1661
  %v1886 = vpack.c.b16 %v1670, %v1666
  %v1887 = vpack.c.b16 %v1671, %v1667
  %v1888 = vpack.c.b16 %v1672, %v1668
  %v1889 = vpack.c.b16 %v1673, %v1669
  %v1890 = vpack.c.b16 %v1678, %v1674
  %v1891 = vpack.c.b16 %v1679, %v1675
  %v1892 = vpack.c.b16 %v1680, %v1676
  %v1893 = vpack.c.b16 %v1681, %v1677
  %v1894 = vpack.c.b16 %v1686, %v1682
  %v1895 = vpack.c.b16 %v1687, %v1683
  %v1896 = vpack.c.b16 %v1688, %v1684
  %v1897 = vpack.c.b16 %v1689, %v1685
  %v1898 = vpack.c.b16 %v1694, %v1690
  %v1899 = vpack.c.b16 %v1695, %v1691
  %v1900 = vpack.c.b16 %v1696, %v1692
  %v1901 = vpack.c.b16 %v1697, %v1693
  %v1902 = vpack.c.b16 %v1702, %v1698
  %v1903 = vpack.c.b16 %v1703, %v1699
  %v1904 = vpack.c.b16 %v1704, %v1700
  %v1905 = vpack.c.b16 %v1705, %v1701
  %v1906 = vpack.c.b16 %v1710, %v1706
  %v1907 = vpack.c.b16 %v1711, %v1707
  %v1908 = vpack.c.b16 %v1712, %v1708
  %v1909 = vpack.c.b16 %v1713, %v1709
  %v1910 = vpack.c.b16 %v1718, %v1714
  %v1911 = vpack.c.b16 %v1719, %v1715
  %v1912 = vpack.c.b16 %v1720, %v1716
  %v1913 = vpack.c.b16 %v1721, %v1717
  %v1914 = vpack.c.b16 %v1726, %v1722
  %v1915 = vpack.c.b16 %v1727, %v1723
  %v1916 = vpack.c.b16 %v1728, %v1724
  %v1917 = vpack.c.b16 %v1729, %v1725
  %v1918 = vpack.c.b16 %v1734, %v1730
  %v1919 = vpack.c.b16 %v1735, %v1731
  %v1920 = vpack.c.b16 %v1736, %v1732
  %v1921 = vpack.c.b16 %v1737, %v1733
  %v1922 = vpack.c.b16 %v1742, %v1738
  %v1923 = vpack.c.b16 %v1743, %v1739
  %v1924 = vpack.c.b16 %v1744, %v1740
  %v1925 = vpack.c.b16 %v1745, %v1741
  %v1926 = vpack.c.b16 %v1750, %v1746
  %v1927 = vpack.c.b16 %v1751, %v1747
  %v1928 = vpack.c.b16 %v1752, %v1748
  %v1929 = vpack.c.b16 %v1753, %v1749
  %v1930 = vpack.c.b16 %v1758, %v1754
  %v1931 = vpack.c.b16 %v1759, %v1755
  %v1932 = vpack.c.b16 %v1760, %v1756
  %v1933 = vpack.c.b16 %v1761, %v1757
  %v1934 = vpack.c.b16 %v1766, %v1762
  %v1935 = vpack.c.b16 %v1767, %v1763
  %v1936 = vpack.c.b16 %v1768, %v1764
  %v1937 = vpack.c.b16 %v1769, %v1765
  %v1938 = vpack.c.b16 %v1774, %v1770
  %v1939 = vpack.c.b16 %v1775, %v1771
  %v1940 = vpack.c.b16 %v1776, %v1772
  %v1941 = vpack.c.b16 %v1777, %v1773
  %v1942 = vpack.c.b16 %v1782, %v1778
  %v1943 = vpack.c.b16 %v1783, %v1779
  %v1944 = vpack.c.b16 %v1784, %v1780
  %v1945 = vpack.c.b16 %v1785, %v1781
  %v1946 = vpack.c.b16 %v1790, %v1786
  %v1947 = vpack.c.b16 %v1791, %v1787
  %v1948 = vpack.c.b16 %v1792, %v1788
  %v1949 = vpack.c.b16 %v1793, %v1789
  %v1950 = vpack.c.b16 %v1798, %v1794
  %v1951 = vpack.c.b16 %v1799, %v1795
  %v1952 = vpack.c.b16 %v1800, %v1796
  %v1953 = vpack.c.b16 %v1801, %v1797
  %v1954 = vpack.c.b16 %v1806, %v1802
  %v1955 = vpack.c.b16 %v1807, %v1803
  %v1956 = vpack.c.b16 %v1808, %v1804
  %v1957 = vpack.c.b16 %v1809, %v1805
  %v1958 = vpack.c.b16 %v1814, %v1810
  %v1959 = vpack.c.b16 %v1815, %v1811
  %v1960 = vpack.c.b16 %v1816, %v1812
  %v1961 = vpack.c.b16 %v1817, %v1813
  %v1962 = vpack.c.b16 %v1822, %v1818
  %v1963 = vpack.c.b16 %v1823, %v1819
  %v1964 = vpack.c.b16 %v1824, %v1820
  %v1965 = vpack.c.b16 %v1825, %v1821
  %v1966 = vpack.c.b16 %v1830, %v1826
  %v1967 = vpack.c.b16 %v1831, %v1827
  %v1968 = vpack.c.b16 %v1832, %v1828
  %v1969 = vpack.c.b16 %v1833, %v1829
  %v1970 = vpack.c.b16 %v1838, %v1834
  %v1971 = vpack.c.b16 %v1839, %v1835
  %v1972 = vpack.c.b16 %v1840, %v1836
  %v1973 = vpack.c.b16 %v1841, %v1837
  %v1974 = vpack.c.b16 %v1846, %v1842
  %v1975 = vpack.c.b16 %v1847, %v1843
  %v1976 = vpack.c.b16 %v1848, %v1844
  %v1977 = vpack.c.b16 %v1849, %v1845
  %2106 = vmatprep.subr.bf16.mxu0 %v1879
  %2107 = vmatpush1.bf16.msra.mxu0 %v1878
  %2108 = vmatprep.subr.bf16.mxu0 %v1875
  %2109 = vmatpush1.bf16.msra.mxu0 %v1874
  %2110 = vmatprep.subr.bf16.mxu0 %v1871
  %2111 = vmatpush1.bf16.msra.mxu0 %v1870
  %2112 = vmatprep.subr.bf16.mxu0 %v1867
  %2113 = vmatpush1.bf16.msra.mxu0 %v1866
  %2114 = vmatprep.subr.bf16.mxu0 %v1863
  %2115 = vmatpush1.bf16.msra.mxu0 %v1862
  %2116 = vmatprep.subr.bf16.mxu0 %v1859
  %2117 = vmatpush1.bf16.msra.mxu0 %v1858
  %2118 = vmatprep.subr.bf16.mxu0 %v1855
  %2119 = vmatpush1.bf16.msra.mxu0 %v1854
  %2120 = vmatprep.subr.bf16.mxu0 %v1851
  %2121 = vmatpush1.bf16.msra.mxu0 %v1850
  %2122 = vmatprep.subr.bf16.mxu0 %v1911
  %2123 = vmatpush2.bf16.msra.mxu0 %v1910
  %2124 = vmatprep.subr.bf16.mxu0 %v1907
  %2125 = vmatpush2.bf16.msra.mxu0 %v1906
  %2126 = vmatprep.subr.bf16.mxu0 %v1903
  %2127 = vmatpush2.bf16.msra.mxu0 %v1902
  %2128 = vmatprep.subr.bf16.mxu0 %v1899
  %2129 = vmatpush2.bf16.msra.mxu0 %v1898
  %2130 = vmatprep.subr.bf16.mxu0 %v1895
  %2131 = vmatpush2.bf16.msra.mxu0 %v1894
  %2132 = vmatprep.subr.bf16.mxu0 %v1891
  %2133 = vmatpush2.bf16.msra.mxu0 %v1890
  %2134 = vmatprep.subr.bf16.mxu0 %v1887
  %2135 = vmatpush2.bf16.msra.mxu0 %v1886
  %2136 = vmatprep.subr.bf16.mxu0 %v1883
  %2137 = vmatpush2.bf16.msra.mxu0 %v1882
  %2138 = vmatprep.mubr.bf16.mxu0 %v1313
  %2139 = vmatmul.mubr.bf16.gmra.mxu0 %v1312
  %v2140 = vpop.f32.mrf.mxu0
  %v2141 = vadd.f32 %v1449, %v2140
  %v2142 = vpop.f32.mrf.mxu0
  %v2143 = vadd.f32 %v1453, %v2142
  %v2144 = vpop.f32.mrf.mxu0
  %v2145 = vpop.f32.mrf.mxu0
  %2146 = vdwg.mxu0
  %2147 = vmatprep.subr.bf16.mxu0 %v1943
  %2148 = vmatpush1.bf16.msra.mxu0 %v1942
  %2149 = vmatprep.subr.bf16.mxu0 %v1939
  %2150 = vmatpush1.bf16.msra.mxu0 %v1938
  %2151 = vmatprep.subr.bf16.mxu0 %v1935
  %2152 = vmatpush1.bf16.msra.mxu0 %v1934
  %2153 = vmatprep.subr.bf16.mxu0 %v1931
  %2154 = vmatpush1.bf16.msra.mxu0 %v1930
  %2155 = vmatprep.subr.bf16.mxu0 %v1927
  %2156 = vmatpush1.bf16.msra.mxu0 %v1926
  %2157 = vmatprep.subr.bf16.mxu0 %v1923
  %2158 = vmatpush1.bf16.msra.mxu0 %v1922
  %2159 = vmatprep.subr.bf16.mxu0 %v1919
  %2160 = vmatpush1.bf16.msra.mxu0 %v1918
  %2161 = vmatprep.subr.bf16.mxu0 %v1915
  %2162 = vmatpush1.bf16.msra.mxu0 %v1914
  %2163 = vmatprep.subr.bf16.mxu0 %v1975
  %2164 = vmatpush2.bf16.msra.mxu0 %v1974
  %2165 = vmatprep.subr.bf16.mxu0 %v1971
  %2166 = vmatpush2.bf16.msra.mxu0 %v1970
  %2167 = vmatprep.subr.bf16.mxu0 %v1967
  %2168 = vmatpush2.bf16.msra.mxu0 %v1966
  %2169 = vmatprep.subr.bf16.mxu0 %v1963
  %2170 = vmatpush2.bf16.msra.mxu0 %v1962
  %2171 = vmatprep.subr.bf16.mxu0 %v1959
  %2172 = vmatpush2.bf16.msra.mxu0 %v1958
  %2173 = vmatprep.subr.bf16.mxu0 %v1955
  %2174 = vmatpush2.bf16.msra.mxu0 %v1954
  %2175 = vmatprep.subr.bf16.mxu0 %v1951
  %2176 = vmatpush2.bf16.msra.mxu0 %v1950
  %2177 = vmatprep.subr.bf16.mxu0 %v1947
  %2178 = vmatpush2.bf16.msra.mxu0 %v1946
  %2179 = vmatprep.mubr.bf16.mxu0 %v1315
  %2180 = vmatmul.mubr.bf16.gmra.mxu0 %v1314
  %v2181 = vpop.f32.mrf.mxu0
  %v2182 = vadd.f32 %v2141, %v2181
  %v2183 = vpop.f32.mrf.mxu0
  %v2184 = vadd.f32 %v2143, %v2183
  %v2185 = vpop.f32.mrf.mxu0
  %v2186 = vpop.f32.mrf.mxu0
  %2187 = vdwg.mxu0
  %2188 = vmatprep.subr.bf16.mxu0 %v1881
  %2189 = vmatpush1.bf16.msra.mxu0 %v1880
  %2190 = vmatprep.subr.bf16.mxu0 %v1877
  %2191 = vmatpush1.bf16.msra.mxu0 %v1876
  %2192 = vmatprep.subr.bf16.mxu0 %v1873
  %2193 = vmatpush1.bf16.msra.mxu0 %v1872
  %2194 = vmatprep.subr.bf16.mxu0 %v1869
  %2195 = vmatpush1.bf16.msra.mxu0 %v1868
  %2196 = vmatprep.subr.bf16.mxu0 %v1865
  %2197 = vmatpush1.bf16.msra.mxu0 %v1864
  %2198 = vmatprep.subr.bf16.mxu0 %v1861
  %2199 = vmatpush1.bf16.msra.mxu0 %v1860
  %2200 = vmatprep.subr.bf16.mxu0 %v1857
  %2201 = vmatpush1.bf16.msra.mxu0 %v1856
  %2202 = vmatprep.subr.bf16.mxu0 %v1853
  %2203 = vmatpush1.bf16.msra.mxu0 %v1852
  %2204 = vmatprep.subr.bf16.mxu0 %v1913
  %2205 = vmatpush2.bf16.msra.mxu0 %v1912
  %2206 = vmatprep.subr.bf16.mxu0 %v1909
  %2207 = vmatpush2.bf16.msra.mxu0 %v1908
  %2208 = vmatprep.subr.bf16.mxu0 %v1905
  %2209 = vmatpush2.bf16.msra.mxu0 %v1904
  %2210 = vmatprep.subr.bf16.mxu0 %v1901
  %2211 = vmatpush2.bf16.msra.mxu0 %v1900
  %2212 = vmatprep.subr.bf16.mxu0 %v1897
  %2213 = vmatpush2.bf16.msra.mxu0 %v1896
  %2214 = vmatprep.subr.bf16.mxu0 %v1893
  %2215 = vmatpush2.bf16.msra.mxu0 %v1892
  %2216 = vmatprep.subr.bf16.mxu0 %v1889
  %2217 = vmatpush2.bf16.msra.mxu0 %v1888
  %2218 = vmatprep.subr.bf16.mxu0 %v1885
  %2219 = vmatpush2.bf16.msra.mxu0 %v1884
  %2220 = vmatprep.mubr.bf16.mxu0 %v1313
  %2221 = vmatmul.mubr.bf16.gmra.mxu0 %v1312
  %v2222 = vpop.f32.mrf.mxu0
  %v2223 = vadd.f32 %v1457, %v2222
  %v2224 = vpop.f32.mrf.mxu0
  %v2225 = vadd.f32 %v1461, %v2224
  %v2226 = vpop.f32.mrf.mxu0
  %v2227 = vpop.f32.mrf.mxu0
  %2228 = vdwg.mxu0
  %2229 = vmatprep.subr.bf16.mxu0 %v1945
  %2230 = vmatpush1.bf16.msra.mxu0 %v1944
  %2231 = vmatprep.subr.bf16.mxu0 %v1941
  %2232 = vmatpush1.bf16.msra.mxu0 %v1940
  %2233 = vmatprep.subr.bf16.mxu0 %v1937
  %2234 = vmatpush1.bf16.msra.mxu0 %v1936
  %2235 = vmatprep.subr.bf16.mxu0 %v1933
  %2236 = vmatpush1.bf16.msra.mxu0 %v1932
  %2237 = vmatprep.subr.bf16.mxu0 %v1929
  %2238 = vmatpush1.bf16.msra.mxu0 %v1928
  %2239 = vmatprep.subr.bf16.mxu0 %v1925
  %2240 = vmatpush1.bf16.msra.mxu0 %v1924
  %2241 = vmatprep.subr.bf16.mxu0 %v1921
  %2242 = vmatpush1.bf16.msra.mxu0 %v1920
  %2243 = vmatprep.subr.bf16.mxu0 %v1917
  %2244 = vmatpush1.bf16.msra.mxu0 %v1916
  %2245 = vmatprep.subr.bf16.mxu0 %v1977
  %2246 = vmatpush2.bf16.msra.mxu0 %v1976
  %2247 = vmatprep.subr.bf16.mxu0 %v1973
  %2248 = vmatpush2.bf16.msra.mxu0 %v1972
  %2249 = vmatprep.subr.bf16.mxu0 %v1969
  %2250 = vmatpush2.bf16.msra.mxu0 %v1968
  %2251 = vmatprep.subr.bf16.mxu0 %v1965
  %2252 = vmatpush2.bf16.msra.mxu0 %v1964
  %2253 = vmatprep.subr.bf16.mxu0 %v1961
  %2254 = vmatpush2.bf16.msra.mxu0 %v1960
  %2255 = vmatprep.subr.bf16.mxu0 %v1957
  %2256 = vmatpush2.bf16.msra.mxu0 %v1956
  %2257 = vmatprep.subr.bf16.mxu0 %v1953
  %2258 = vmatpush2.bf16.msra.mxu0 %v1952
  %2259 = vmatprep.subr.bf16.mxu0 %v1949
  %2260 = vmatpush2.bf16.msra.mxu0 %v1948
  %2261 = vmatprep.mubr.bf16.mxu0 %v1315
  %2262 = vmatmul.mubr.bf16.gmra.mxu0 %v1314
  %v2263 = vpop.f32.mrf.mxu0
  %v2264 = vadd.f32 %v2223, %v2263
  %v2265 = vpop.f32.mrf.mxu0
  %v2266 = vadd.f32 %v2225, %v2265
  %v2267 = vpop.f32.mrf.mxu0
  %v2268 = vpop.f32.mrf.mxu0
  %2269 = vdwg.mxu0
  %vm2270 = vcmp.gt.f32.partialorder %v2182, 0.0
  %vm2271 = vcmp.gt.f32.partialorder %v2184, 0.0
  %vm2272 = vcmp.gt.f32.partialorder %v2264, 0.0
  %vm2273 = vcmp.gt.f32.partialorder %v2266, 0.0
  %v2274 = vmul.f32 %v2182, 0.2
  %v2275 = vmul.f32 %v2184, 0.2
  %v2276 = vmul.f32 %v2264, 0.2
  %v2277 = vmul.f32 %v2266, 0.2
  %v2278 = vsel %vm2270, %v2182, %v2274
  %v2279 = vsel %vm2271, %v2184, %v2275
  %v2280 = vsel %vm2272, %v2264, %v2276
  %v2281 = vsel %vm2273, %v2266, %v2277
  %v2282 = vpack.c.bf16 %v2278, %v2278
  %v2283 = vpack.c.bf16 %v2279, %v2279
  %v2284 = vpack.c.bf16 %v2280, %v2280
  %v2285 = vpack.c.bf16 %v2281, %v2281
  %v2286 = vld [vmem:[%s7] sm:$0xf]
  %v2287 = vld [vmem:[%s7 + $0x4] sm:$0xf]
  %v2288 = vld [vmem:[%s7 + $0x8] sm:$0xf]
  %v2289 = vld [vmem:[%s7 + $0xc] sm:$0xf]
  %v2290 = vld [vmem:[%s7 + $0x10] sm:$0xf]
  %v2291 = vld [vmem:[%s7 + $0x14] sm:$0xf]
  %v2292 = vld [vmem:[%s7 + $0x18] sm:$0xf]
  %v2293 = vld [vmem:[%s7 + $0x1c] sm:$0xf]
  %v2294 = vld [vmem:[%s7 + $0x20] sm:$0xf]
  %v2295 = vld [vmem:[%s7 + $0x24] sm:$0xf]
  %v2296 = vld [vmem:[%s7 + $0x28] sm:$0xf]
  %v2297 = vld [vmem:[%s7 + $0x2c] sm:$0xf]
  %v2298 = vld [vmem:[%s7 + $0x30] sm:$0xf]
  %v2299 = vld [vmem:[%s7 + $0x34] sm:$0xf]
  %v2300 = vld [vmem:[%s7 + $0x38] sm:$0xf]
  %v2301 = vld [vmem:[%s7 + $0x3c] sm:$0xf]
  %v2302 = vld [vmem:[%s7 + $0x40] sm:$0xf]
  %v2303 = vld [vmem:[%s7 + $0x44] sm:$0xf]
  %v2304 = vld [vmem:[%s7 + $0x48] sm:$0xf]
  %v2305 = vld [vmem:[%s7 + $0x4c] sm:$0xf]
  %v2306 = vld [vmem:[%s7 + $0x50] sm:$0xf]
  %v2307 = vld [vmem:[%s7 + $0x54] sm:$0xf]
  %v2308 = vld [vmem:[%s7 + $0x58] sm:$0xf]
  %v2309 = vld [vmem:[%s7 + $0x5c] sm:$0xf]
  %v2310 = vld [vmem:[%s7 + $0x60] sm:$0xf]
  %v2311 = vld [vmem:[%s7 + $0x64] sm:$0xf]
  %v2312 = vld [vmem:[%s7 + $0x68] sm:$0xf]
  %v2313 = vld [vmem:[%s7 + $0x6c] sm:$0xf]
  %v2314 = vld [vmem:[%s7 + $0x70] sm:$0xf]
  %v2315 = vld [vmem:[%s7 + $0x74] sm:$0xf]
  %v2316 = vld [vmem:[%s7 + $0x78] sm:$0xf]
  %v2317 = vld [vmem:[%s7 + $0x7c] sm:$0xf]
  %v2318 = vld [vmem:[%s7 + $0x80] sm:$0xf]
  %v2319 = vld [vmem:[%s7 + $0x84] sm:$0xf]
  %v2320 = vld [vmem:[%s7 + $0x88] sm:$0xf]
  %v2321 = vld [vmem:[%s7 + $0x8c] sm:$0xf]
  %v2322 = vld [vmem:[%s7 + $0x90] sm:$0xf]
  %v2323 = vld [vmem:[%s7 + $0x94] sm:$0xf]
  %v2324 = vld [vmem:[%s7 + $0x98] sm:$0xf]
  %v2325 = vld [vmem:[%s7 + $0x9c] sm:$0xf]
  %v2326 = vld [vmem:[%s7 + $0xa0] sm:$0xf]
  %v2327 = vld [vmem:[%s7 + $0xa4] sm:$0xf]
  %v2328 = vld [vmem:[%s7 + $0xa8] sm:$0xf]
  %v2329 = vld [vmem:[%s7 + $0xac] sm:$0xf]
  %v2330 = vld [vmem:[%s7 + $0xb0] sm:$0xf]
  %v2331 = vld [vmem:[%s7 + $0xb4] sm:$0xf]
  %v2332 = vld [vmem:[%s7 + $0xb8] sm:$0xf]
  %v2333 = vld [vmem:[%s7 + $0xbc] sm:$0xf]
  %v2334 = vld [vmem:[%s7 + $0xc0] sm:$0xf]
  %v2335 = vld [vmem:[%s7 + $0xc4] sm:$0xf]
  %v2336 = vld [vmem:[%s7 + $0xc8] sm:$0xf]
  %v2337 = vld [vmem:[%s7 + $0xcc] sm:$0xf]
  %v2338 = vld [vmem:[%s7 + $0xd0] sm:$0xf]
  %v2339 = vld [vmem:[%s7 + $0xd4] sm:$0xf]
  %v2340 = vld [vmem:[%s7 + $0xd8] sm:$0xf]
  %v2341 = vld [vmem:[%s7 + $0xdc] sm:$0xf]
  %v2342 = vld [vmem:[%s7 + $0xe0] sm:$0xf]
  %v2343 = vld [vmem:[%s7 + $0xe4] sm:$0xf]
  %v2344 = vld [vmem:[%s7 + $0xe8] sm:$0xf]
  %v2345 = vld [vmem:[%s7 + $0xec] sm:$0xf]
  %v2346 = vld [vmem:[%s7 + $0xf0] sm:$0xf]
  %v2347 = vld [vmem:[%s7 + $0xf4] sm:$0xf]
  %v2348 = vld [vmem:[%s7 + $0xf8] sm:$0xf]
  %v2349 = vld [vmem:[%s7 + $0xfc] sm:$0xf]
  %v2350 = vld [vmem:[%s8] sm:$0x1]
  %v2352 = vlaneseq
  %v2353 = vshrl.u32 %v2352, 7
  %v2354 = vsub.s32 0, %v2353
  %v2355 = vrot.slane %v2350, %v2354
  %v2421 = vunpack.c.l.b16 %v2286
  %v2422 = vunpack.c.l.b16 %v2287
  %v2423 = vunpack.c.l.b16 %v2288
  %v2424 = vunpack.c.l.b16 %v2289
  %v2425 = vunpack.c.l.b16 %v2290
  %v2426 = vunpack.c.l.b16 %v2291
  %v2427 = vunpack.c.l.b16 %v2292
  %v2428 = vunpack.c.l.b16 %v2293
  %v2429 = vunpack.c.l.b16 %v2294
  %v2430 = vunpack.c.l.b16 %v2295
  %v2431 = vunpack.c.l.b16 %v2296
  %v2432 = vunpack.c.l.b16 %v2297
  %v2433 = vunpack.c.l.b16 %v2298
  %v2434 = vunpack.c.l.b16 %v2299
  %v2435 = vunpack.c.l.b16 %v2300
  %v2436 = vunpack.c.l.b16 %v2301
  %v2437 = vunpack.c.l.b16 %v2302
  %v2438 = vunpack.c.l.b16 %v2303
  %v2439 = vunpack.c.l.b16 %v2304
  %v2440 = vunpack.c.l.b16 %v2305
  %v2441 = vunpack.c.l.b16 %v2306
  %v2442 = vunpack.c.l.b16 %v2307
  %v2443 = vunpack.c.l.b16 %v2308
  %v2444 = vunpack.c.l.b16 %v2309
  %v2445 = vunpack.c.l.b16 %v2310
  %v2446 = vunpack.c.l.b16 %v2311
  %v2447 = vunpack.c.l.b16 %v2312
  %v2448 = vunpack.c.l.b16 %v2313
  %v2449 = vunpack.c.l.b16 %v2314
  %v2450 = vunpack.c.l.b16 %v2315
  %v2451 = vunpack.c.l.b16 %v2316
  %v2452 = vunpack.c.l.b16 %v2317
  %v2453 = vunpack.c.l.b16 %v2318
  %v2454 = vunpack.c.l.b16 %v2319
  %v2455 = vunpack.c.l.b16 %v2320
  %v2456 = vunpack.c.l.b16 %v2321
  %v2457 = vunpack.c.l.b16 %v2322
  %v2458 = vunpack.c.l.b16 %v2323
  %v2459 = vunpack.c.l.b16 %v2324
  %v2460 = vunpack.c.l.b16 %v2325
  %v2461 = vunpack.c.l.b16 %v2326
  %v2462 = vunpack.c.l.b16 %v2327
  %v2463 = vunpack.c.l.b16 %v2328
  %v2464 = vunpack.c.l.b16 %v2329
  %v2465 = vunpack.c.l.b16 %v2330
  %v2466 = vunpack.c.l.b16 %v2331
  %v2467 = vunpack.c.l.b16 %v2332
  %v2468 = vunpack.c.l.b16 %v2333
  %v2469 = vunpack.c.l.b16 %v2334
  %v2470 = vunpack.c.l.b16 %v2335
  %v2471 = vunpack.c.l.b16 %v2336
  %v2472 = vunpack.c.l.b16 %v2337
  %v2473 = vunpack.c.l.b16 %v2338
  %v2474 = vunpack.c.l.b16 %v2339
  %v2475 = vunpack.c.l.b16 %v2340
  %v2476 = vunpack.c.l.b16 %v2341
  %v2477 = vunpack.c.l.b16 %v2342
  %v2478 = vunpack.c.l.b16 %v2343
  %v2479 = vunpack.c.l.b16 %v2344
  %v2480 = vunpack.c.l.b16 %v2345
  %v2481 = vunpack.c.l.b16 %v2346
  %v2482 = vunpack.c.l.b16 %v2347
  %v2483 = vunpack.c.l.b16 %v2348
  %v2484 = vunpack.c.l.b16 %v2349
  %v2485 = vpack.c.b16 %v2422, %v2421
  %v2486 = vpack.c.b16 %v2424, %v2423
  %v2487 = vpack.c.b16 %v2426, %v2425
  %v2488 = vpack.c.b16 %v2428, %v2427
  %v2489 = vpack.c.b16 %v2430, %v2429
  %v2490 = vpack.c.b16 %v2432, %v2431
  %v2491 = vpack.c.b16 %v2434, %v2433
  %v2492 = vpack.c.b16 %v2436, %v2435
  %v2493 = vpack.c.b16 %v2438, %v2437
  %v2494 = vpack.c.b16 %v2440, %v2439
  %v2495 = vpack.c.b16 %v2442, %v2441
  %v2496 = vpack.c.b16 %v2444, %v2443
  %v2497 = vpack.c.b16 %v2446, %v2445
  %v2498 = vpack.c.b16 %v2448, %v2447
  %v2499 = vpack.c.b16 %v2450, %v2449
  %v2500 = vpack.c.b16 %v2452, %v2451
  %v2501 = vpack.c.b16 %v2454, %v2453
  %v2502 = vpack.c.b16 %v2456, %v2455
  %v2503 = vpack.c.b16 %v2458, %v2457
  %v2504 = vpack.c.b16 %v2460, %v2459
  %v2505 = vpack.c.b16 %v2462, %v2461
  %v2506 = vpack.c.b16 %v2464, %v2463
  %v2507 = vpack.c.b16 %v2466, %v2465
  %v2508 = vpack.c.b16 %v2468, %v2467
  %v2509 = vpack.c.b16 %v2470, %v2469
  %v2510 = vpack.c.b16 %v2472, %v2471
  %v2511 = vpack.c.b16 %v2474, %v2473
  %v2512 = vpack.c.b16 %v2476, %v2475
  %v2513 = vpack.c.b16 %v2478, %v2477
  %v2514 = vpack.c.b16 %v2480, %v2479
  %v2515 = vpack.c.b16 %v2482, %v2481
  %v2516 = vpack.c.b16 %v2484, %v2483
  %2549 = vmatprep.subr.bf16.mxu0 0
  %2550 = vmatpush1.bf16.msra.mxu0 %v2492
  %2551 = vmatprep.subr.bf16.mxu0 0
  %2552 = vmatpush1.bf16.msra.mxu0 %v2491
  %2553 = vmatprep.subr.bf16.mxu0 0
  %2554 = vmatpush1.bf16.msra.mxu0 %v2490
  %2555 = vmatprep.subr.bf16.mxu0 0
  %2556 = vmatpush1.bf16.msra.mxu0 %v2489
  %2557 = vmatprep.subr.bf16.mxu0 0
  %2558 = vmatpush1.bf16.msra.mxu0 %v2488
  %2559 = vmatprep.subr.bf16.mxu0 0
  %2560 = vmatpush1.bf16.msra.mxu0 %v2487
  %2561 = vmatprep.subr.bf16.mxu0 0
  %2562 = vmatpush1.bf16.msra.mxu0 %v2486
  %2563 = vmatprep.subr.bf16.mxu0 0
  %2564 = vmatpush1.bf16.msra.mxu0 %v2485
  %2565 = vmatprep.subr.bf16.mxu0 0
  %2566 = vmatpush2.bf16.msra.mxu0 %v2500
  %2567 = vmatprep.subr.bf16.mxu0 0
  %2568 = vmatpush2.bf16.msra.mxu0 %v2499
  %2569 = vmatprep.subr.bf16.mxu0 0
  %2570 = vmatpush2.bf16.msra.mxu0 %v2498
  %2571 = vmatprep.subr.bf16.mxu0 0
  %2572 = vmatpush2.bf16.msra.mxu0 %v2497
  %2573 = vmatprep.subr.bf16.mxu0 0
  %2574 = vmatpush2.bf16.msra.mxu0 %v2496
  %2575 = vmatprep.subr.bf16.mxu0 0
  %2576 = vmatpush2.bf16.msra.mxu0 %v2495
  %2577 = vmatprep.subr.bf16.mxu0 0
  %2578 = vmatpush2.bf16.msra.mxu0 %v2494
  %2579 = vmatprep.subr.bf16.mxu0 0
  %2580 = vmatpush2.bf16.msra.mxu0 %v2493
  %2581 = vmatprep.mubr.bf16.mxu0 %v2283
  %2582 = vmatmul.mubr.bf16.gmra.mxu0 %v2282
  %v2583 = vpop.f32.mrf.mxu0
  %v2584 = vadd.f32 %v2355, %v2583
  %v2585 = vpop.f32.mrf.mxu0
  %v2586 = vpop.f32.mrf.mxu0
  %v2587 = vpop.f32.mrf.mxu0
  %2588 = vdwg.mxu0
  %2589 = vmatprep.subr.bf16.mxu0 0
  %2590 = vmatpush1.bf16.msra.mxu0 %v2508
  %2591 = vmatprep.subr.bf16.mxu0 0
  %2592 = vmatpush1.bf16.msra.mxu0 %v2507
  %2593 = vmatprep.subr.bf16.mxu0 0
  %2594 = vmatpush1.bf16.msra.mxu0 %v2506
  %2595 = vmatprep.subr.bf16.mxu0 0
  %2596 = vmatpush1.bf16.msra.mxu0 %v2505
  %2597 = vmatprep.subr.bf16.mxu0 0
  %2598 = vmatpush1.bf16.msra.mxu0 %v2504
  %2599 = vmatprep.subr.bf16.mxu0 0
  %2600 = vmatpush1.bf16.msra.mxu0 %v2503
  %2601 = vmatprep.subr.bf16.mxu0 0
  %2602 = vmatpush1.bf16.msra.mxu0 %v2502
  %2603 = vmatprep.subr.bf16.mxu0 0
  %2604 = vmatpush1.bf16.msra.mxu0 %v2501
  %2605 = vmatprep.subr.bf16.mxu0 0
  %2606 = vmatpush2.bf16.msra.mxu0 %v2516
  %2607 = vmatprep.subr.bf16.mxu0 0
  %2608 = vmatpush2.bf16.msra.mxu0 %v2515
  %2609 = vmatprep.subr.bf16.mxu0 0
  %2610 = vmatpush2.bf16.msra.mxu0 %v2514
  %2611 = vmatprep.subr.bf16.mxu0 0
  %2612 = vmatpush2.bf16.msra.mxu0 %v2513
  %2613 = vmatprep.subr.bf16.mxu0 0
  %2614 = vmatpush2.bf16.msra.mxu0 %v2512
  %2615 = vmatprep.subr.bf16.mxu0 0
  %2616 = vmatpush2.bf16.msra.mxu0 %v2511
  %2617 = vmatprep.subr.bf16.mxu0 0
  %2618 = vmatpush2.bf16.msra.mxu0 %v2510
  %2619 = vmatprep.subr.bf16.mxu0 0
  %2620 = vmatpush2.bf16.msra.mxu0 %v2509
  %2621 = vmatprep.mubr.bf16.mxu0 %v2285
  %2622 = vmatmul.mubr.bf16.gmra.mxu0 %v2284
  %v2623 = vpop.f32.mrf.mxu0
  %v2624 = vadd.f32 %v2584, %v2623
  %v2625 = vpop.f32.mrf.mxu0
  %v2626 = vpop.f32.mrf.mxu0
  %v2627 = vpop.f32.mrf.mxu0
  %2628 = vdwg.mxu0
  %2629 = vst [vmem:[%s9] sm:$0xff] %v2624
  // Predicated region
  $region38: #{discriminator_forward.1} parent=0 // pred_check
    _
  $region39: #{discriminator_forward.1} parent=0 // pred_check_branch
    %2631 = sbr.rel (0) target = $region41
  $region40: #{discriminator_forward.1} parent=0 // pred_region
    _
  $region41: #{discriminator_forward.1} parent=0 // pred_fallthru
    _
  // Predicated region
  $region42: #{discriminator_forward.1} parent=0 // pred_check
    _
  $region43: #{discriminator_forward.1} parent=0 // pred_check_branch
    %2633 = sbr.rel (0) target = $region45
  $region44: #{discriminator_forward.1} parent=0 // pred_region
    _
  $region45: #{discriminator_forward.1} parent=0 // pred_fallthru
    _

</llo_original>
